<compile_context>
chip_gen: v6e
topology: v6e:2x2x1
jax: 0.10.0
libtpu: 0.0.40
codegen_flags: <defaults>
</compile_context>

<pallas_src>
import functools

import jax
import jax.numpy as jnp
from jax import lax
from jax.experimental import pallas as pl
from jax.experimental.pallas import tpu as pltpu


# ---------------------------------------------------------------------------
# Fused kernel: one grid step == one batch element
# ---------------------------------------------------------------------------
def _gated_attention_kernel(
    x_ref,        # (1, N, C)   activations for this batch element
    w_qkv_ref,    # (C, 3C)     pre-transposed QKV weight (VMEM-resident)
    b_qkv_ref,    # (1, 3C)
    w_proj_ref,   # (C, C)      pre-transposed output-proj weight
    b_proj_ref,   # (1, C)
    o_ref,        # (1, N, C)   output block
    attn_ref,     # VMEM scratch (N, C) in compute dtype: attention-output slab
    *,
    num_heads: int,
    q_scale: float,
):
    N, C = x_ref.shape[1], x_ref.shape[2]
    D = C // num_heads
    cdt = x_ref.dtype        # compute dtype for MXU operands (bf16 in -> bf16 MXU)

    x = x_ref[0]                                                   # (N, C)

    # --- QKV projection: single MXU matmul, f32 accumulation ---------------
    qkv = jnp.dot(x, w_qkv_ref[...], preferred_element_type=jnp.float32)
    qkv = qkv + b_qkv_ref[...]                                     # (N, 3C) f32

    # The 3C axis packs (3, H, D) exactly like torch's reshape(B,N,3,H,D).
    # Fold scale/temp into q once (cheaper than scaling the (N,N) scores).
    q = (qkv[:, 0:C] * q_scale).astype(cdt)                        # (N, C)
    k = qkv[:, C:2 * C].astype(cdt)                                # (N, C)
    v = qkv[:, 2 * C:3 * C].astype(cdt)                            # (N, C)

    # --- per-head attention; heads stay packed along the lane axis ----------
    # H is small (ViT: 8-16) => static unroll keeps all slices/lane offsets
    # compile-time constant (no XLU transposes, no dynamic addressing).
    for h in range(num_heads):
        sl = slice(h * D, (h + 1) * D)
        qh, kh, vh = q[:, sl], k[:, sl], v[:, sl]                  # (N, D) each
        # scores: contract on d directly (no k.T materialisation)
        s = lax.dot_general(qh, kh, (((1,), (1,)), ((), ())),
                            preferred_element_type=jnp.float32)    # (N, N) f32
        s = s - jnp.max(s, axis=-1, keepdims=True)                 # stable softmax
        p = jnp.exp(s)
        inv = pl.reciprocal(jnp.sum(p, axis=-1, keepdims=True), approx=True)
        p = (p * inv).astype(cdt)
        # attn_drop(p=0.0) is identity.
        attn_ref[:, sl] = jnp.dot(
            p, vh, preferred_element_type=jnp.float32).astype(cdt)

    # --- output projection ---------------------------------------------------
    y = jnp.dot(attn_ref[...], w_proj_ref[...],
                preferred_element_type=jnp.float32)
    y = y + b_proj_ref[...]
    # proj_drop(p=0.0) is identity.
    o_ref[0] = y.astype(o_ref.dtype)


# ---------------------------------------------------------------------------
# Wrapper
# ---------------------------------------------------------------------------
def gated_attention_forward(x, params, *, num_heads, temp=1.0):
    """GatedAttention forward. attn_drop/proj_drop default to p=0.0 (identity)."""
    B, N, C = x.shape
    assert C % num_heads == 0, "dim must be divisible by num_heads"
    head_dim = C // num_heads
    q_scale = float(head_dim ** (-0.5)) / float(temp)

    w_qkv_t = params["w_qkv_t"]                 # (C, 3C) — transposed once at init
    b_qkv = params["b_qkv"].reshape(1, 3 * C)
    w_proj_t = params["w_proj_t"]               # (C, C)
    b_proj = params["b_proj"].reshape(1, C)

    kernel = functools.partial(
        _gated_attention_kernel, num_heads=num_heads, q_scale=q_scale)

    # TODO(synk): for very long sequences (large N) switch the inner attention
    # to a KV-tiled online-softmax (flash) form, and for very large C tile the
    # projection weights over a K grid axis; not needed at ViT scale.
    return pl.pallas_call(
        kernel,
        out_shape=jax.ShapeDtypeStruct((B, N, C), x.dtype),
        grid_spec=pltpu.PrefetchScalarGridSpec(
            num_scalar_prefetch=0,
            grid=(B,),
            in_specs=[
                pl.BlockSpec((1, N, C), lambda b: (b, 0, 0)),      # x (per batch)
                pl.BlockSpec((C, 3 * C), lambda b: (0, 0)),        # w_qkv_t (resident)
                pl.BlockSpec((1, 3 * C), lambda b: (0, 0)),        # b_qkv
                pl.BlockSpec((C, C), lambda b: (0, 0)),            # w_proj_t (resident)
                pl.BlockSpec((1, C), lambda b: (0, 0)),            # b_proj
            ],
            out_specs=pl.BlockSpec((1, N, C), lambda b: (b, 0, 0)),
            scratch_shapes=[pltpu.VMEM((N, C), x.dtype)],
        ),
        compiler_params=pltpu.CompilerParams(
            dimension_semantics=("parallel",),          # megacore-shard over batch
            vmem_limit_bytes=48 * 1024 * 1024,          # under v7x's 64 MiB / TC
        ),
    )(x, w_qkv_t, b_qkv, w_proj_t, b_proj)


def init_params(key, dim, qkv_bias=False, dtype=jnp.float32):
    """Create params; torch-style (out, in) weights are transposed ONCE here."""
    k1, k2, k3 = jax.random.split(key, 3)
    w_qkv = jax.random.normal(k1, (3 * dim, dim), dtype) * 0.02     # torch layout
    w_proj = jax.random.normal(k2, (dim, dim), dtype) * 0.02        # torch layout
    b_qkv = (jax.random.normal(k3, (3 * dim,), dtype) * 0.02
             if qkv_bias else jnp.zeros((3 * dim,), dtype))
    b_proj = jnp.zeros((dim,), dtype)
    return {
        "w_qkv_t": jnp.asarray(w_qkv.T),     # (C, 3C)
        "b_qkv": b_qkv,
        "w_proj_t": jnp.asarray(w_proj.T),   # (C, C)
        "b_proj": b_proj,
    }


if __name__ == "__main__":
    # Small deterministic shapes consistent with the module: head_dim = 4.
    B, N, C, H = 2, 8, 32, 8
    key = jax.random.PRNGKey(0)
    kx, kp = jax.random.split(key)
    x = jax.random.normal(kx, (B, N, C), jnp.float32)
    params = init_params(kp, C, qkv_bias=False)

    fwd = jax.jit(functools.partial(gated_attention_forward, num_heads=H, temp=1.0))
    y = fwd(x, params)
    jax.block_until_ready(y)

    # Pure-JAX reference of the same math (exact softmax divide).
    def ref(x):
        qkv = x @ params["w_qkv_t"] + params["b_qkv"]
        qkv = qkv.reshape(B, N, 3, H, C // H).transpose(2, 0, 3, 1, 4)
        q, k, v = qkv[0], qkv[1], qkv[2]
        attn = jnp.einsum("bhqd,bhkd->bhqk", q, k) * (C // H) ** (-0.5)
        attn = jax.nn.softmax(attn / 1.0, axis=-1)
        o = jnp.einsum("bhqk,bhkd->bhqd", attn, v)
        o = o.transpose(0, 2, 1, 3).reshape(B, N, C)
        return o @ params["w_proj_t"] + params["b_proj"]

    # approx=True reciprocal (EUP) => compare with a modest tolerance.
    err = float(jnp.max(jnp.abs(y - ref(x))))
    assert jnp.allclose(y, ref(x), atol=1e-2, rtol=1e-2), err
    print("KERNEL_OK")
</pallas_src>

<mosaic_0001>
module attributes {stable_mosaic.version = 11 : i64} {
  func.func @_gated_attention_kernel(%arg0: i32, %arg1: memref<1x8x32xf32, #tpu.memory_space<vmem>>, %arg2: memref<32x96xf32, #tpu.memory_space<vmem>>, %arg3: memref<1x96xf32, #tpu.memory_space<vmem>>, %arg4: memref<32x32xf32, #tpu.memory_space<vmem>>, %arg5: memref<1x32xf32, #tpu.memory_space<vmem>>, %arg6: memref<1x8x32xf32, #tpu.memory_space<vmem>>, %arg7: memref<8x32xf32, #tpu.memory_space<vmem>>) attributes {dimension_semantics = [#tpu.dimension_semantics<parallel>], iteration_bounds = array<i64: 2>, scalar_prefetch = 0 : i64, scratch_operands = 1 : i64, tpu.core_type = #tpu.core_type<tc>, window_params = [{transform_indices = @transform_0, window_bounds = array<i64: 1, 8, 32>}, {pipeline_mode = #tpu.pipeline_mode<synchronous>, transform_indices = @transform_1, window_bounds = array<i64: 32, 96>}, {pipeline_mode = #tpu.pipeline_mode<synchronous>, transform_indices = @transform_2, window_bounds = array<i64: 1, 96>}, {pipeline_mode = #tpu.pipeline_mode<synchronous>, transform_indices = @transform_3, window_bounds = array<i64: 32, 32>}, {pipeline_mode = #tpu.pipeline_mode<synchronous>, transform_indices = @transform_4, window_bounds = array<i64: 1, 32>}, {transform_indices = @transform_5, window_bounds = array<i64: 1, 8, 32>}]} {
    %c0 = arith.constant 0 : index
    %c0_0 = arith.constant 0 : index
    %c0_1 = arith.constant 0 : index
    %0 = vector.load %arg1[%c0, %c0_0, %c0_1] : memref<1x8x32xf32, #tpu.memory_space<vmem>>, vector<1x8x32xf32>
    %1 = vector.shape_cast %0 : vector<1x8x32xf32> to vector<8x32xf32>
    %c0_2 = arith.constant 0 : index
    %c0_3 = arith.constant 0 : index
    %2 = vector.load %arg2[%c0_2, %c0_3] : memref<32x96xf32, #tpu.memory_space<vmem>>, vector<32x96xf32>
    %cst = arith.constant dense<0.000000e+00> : vector<8x96xf32>
    %3 = tpu.matmul %1, %2, %cst {dimension_numbers = #tpu.dot_dimension_numbers<[1], [0], [0], [1], [0, 0, 1, 1], [], []>} : vector<8x32xf32>, vector<32x96xf32>, vector<8x96xf32> -> vector<8x96xf32>
    %c0_4 = arith.constant 0 : index
    %c0_5 = arith.constant 0 : index
    %4 = vector.load %arg3[%c0_4, %c0_5] : memref<1x96xf32, #tpu.memory_space<vmem>>, vector<1x96xf32>
    %5 = vector.broadcast %4 : vector<1x96xf32> to vector<8x96xf32>
    %6 = arith.addf %3, %5 : vector<8x96xf32>
    %7 = vector.extract_strided_slice %6 {offsets = [0, 0], sizes = [8, 32], strides = [1, 1]} : vector<8x96xf32> to vector<8x32xf32>
    %cst_6 = arith.constant 5.000000e-01 : f32
    %8 = vector.broadcast %cst_6 : f32 to vector<8x32xf32>
    %9 = arith.mulf %7, %8 : vector<8x32xf32>
    %10 = vector.extract_strided_slice %6 {offsets = [0, 32], sizes = [8, 32], strides = [1, 1]} : vector<8x96xf32> to vector<8x32xf32>
    %11 = vector.extract_strided_slice %6 {offsets = [0, 64], sizes = [8, 32], strides = [1, 1]} : vector<8x96xf32> to vector<8x32xf32>
    %12 = vector.extract_strided_slice %9 {offsets = [0, 0], sizes = [8, 4], strides = [1, 1]} : vector<8x32xf32> to vector<8x4xf32>
    %13 = vector.extract_strided_slice %10 {offsets = [0, 0], sizes = [8, 4], strides = [1, 1]} : vector<8x32xf32> to vector<8x4xf32>
    %14 = vector.extract_strided_slice %11 {offsets = [0, 0], sizes = [8, 4], strides = [1, 1]} : vector<8x32xf32> to vector<8x4xf32>
    %cst_7 = arith.constant dense<0.000000e+00> : vector<8x8xf32>
    %15 = tpu.matmul %12, %13, %cst_7 {dimension_numbers = #tpu.dot_dimension_numbers<[1], [1], [0], [0], [0, 0, 1, 0], [], []>} : vector<8x4xf32>, vector<8x4xf32>, vector<8x8xf32> -> vector<8x8xf32>
    %cst_8 = arith.constant dense<0xFF800000> : vector<8xf32>
    %16 = vector.multi_reduction <maximumf>, %15, %cst_8 [1] : vector<8x8xf32> to vector<8xf32>
    %17 = vector.shape_cast %16 : vector<8xf32> to vector<8x1xf32>
    %18 = vector.broadcast %17 : vector<8x1xf32> to vector<8x8xf32>
    %19 = arith.subf %15, %18 : vector<8x8xf32>
    %20 = math.exp %19 : vector<8x8xf32>
    %cst_9 = arith.constant dense<0.000000e+00> : vector<8xf32>
    %21 = vector.multi_reduction <add>, %20, %cst_9 [1] : vector<8x8xf32> to vector<8xf32>
    %22 = vector.shape_cast %21 : vector<8xf32> to vector<8x1xf32>
    %23 = tpu.reciprocal %22 {approx = true} : vector<8x1xf32> -> vector<8x1xf32>
    %24 = vector.broadcast %23 : vector<8x1xf32> to vector<8x8xf32>
    %25 = arith.mulf %20, %24 : vector<8x8xf32>
    %cst_10 = arith.constant dense<0.000000e+00> : vector<8x4xf32>
    %26 = tpu.matmul %25, %14, %cst_10 {dimension_numbers = #tpu.dot_dimension_numbers<[1], [0], [0], [1], [0, 0, 1, 1], [], []>} : vector<8x8xf32>, vector<8x4xf32>, vector<8x4xf32> -> vector<8x4xf32>
    %c0_11 = arith.constant 0 : index
    %c0_12 = arith.constant 0 : index
    %27 = vector.load %arg7[%c0_11, %c0_12] : memref<8x32xf32, #tpu.memory_space<vmem>>, vector<8x4xf32>
    tpu.vector_store %arg7[%c0_11, %c0_12], %26 {strides = array<i32>} : memref<8x32xf32, #tpu.memory_space<vmem>>, vector<8x4xf32>,
    %28 = vector.extract_strided_slice %9 {offsets = [0, 4], sizes = [8, 4], strides = [1, 1]} : vector<8x32xf32> to vector<8x4xf32>
    %29 = vector.extract_strided_slice %10 {offsets = [0, 4], sizes = [8, 4], strides = [1, 1]} : vector<8x32xf32> to vector<8x4xf32>
    %30 = vector.extract_strided_slice %11 {offsets = [0, 4], sizes = [8, 4], strides = [1, 1]} : vector<8x32xf32> to vector<8x4xf32>
    %cst_13 = arith.constant dense<0.000000e+00> : vector<8x8xf32>
    %31 = tpu.matmul %28, %29, %cst_13 {dimension_numbers = #tpu.dot_dimension_numbers<[1], [1], [0], [0], [0, 0, 1, 0], [], []>} : vector<8x4xf32>, vector<8x4xf32>, vector<8x8xf32> -> vector<8x8xf32>
    %cst_14 = arith.constant dense<0xFF800000> : vector<8xf32>
    %32 = vector.multi_reduction <maximumf>, %31, %cst_14 [1] : vector<8x8xf32> to vector<8xf32>
    %33 = vector.shape_cast %32 : vector<8xf32> to vector<8x1xf32>
    %34 = vector.broadcast %33 : vector<8x1xf32> to vector<8x8xf32>
    %35 = arith.subf %31, %34 : vector<8x8xf32>
    %36 = math.exp %35 : vector<8x8xf32>
    %cst_15 = arith.constant dense<0.000000e+00> : vector<8xf32>
    %37 = vector.multi_reduction <add>, %36, %cst_15 [1] : vector<8x8xf32> to vector<8xf32>
    %38 = vector.shape_cast %37 : vector<8xf32> to vector<8x1xf32>
    %39 = tpu.reciprocal %38 {approx = true} : vector<8x1xf32> -> vector<8x1xf32>
    %40 = vector.broadcast %39 : vector<8x1xf32> to vector<8x8xf32>
    %41 = arith.mulf %36, %40 : vector<8x8xf32>
    %cst_16 = arith.constant dense<0.000000e+00> : vector<8x4xf32>
    %42 = tpu.matmul %41, %30, %cst_16 {dimension_numbers = #tpu.dot_dimension_numbers<[1], [0], [0], [1], [0, 0, 1, 1], [], []>} : vector<8x8xf32>, vector<8x4xf32>, vector<8x4xf32> -> vector<8x4xf32>
    %c0_17 = arith.constant 0 : index
    %c4 = arith.constant 4 : index
    %43 = vector.load %arg7[%c0_17, %c4] : memref<8x32xf32, #tpu.memory_space<vmem>>, vector<8x4xf32>
    tpu.vector_store %arg7[%c0_17, %c4], %42 {strides = array<i32>} : memref<8x32xf32, #tpu.memory_space<vmem>>, vector<8x4xf32>,
    %44 = vector.extract_strided_slice %9 {offsets = [0, 8], sizes = [8, 4], strides = [1, 1]} : vector<8x32xf32> to vector<8x4xf32>
    %45 = vector.extract_strided_slice %10 {offsets = [0, 8], sizes = [8, 4], strides = [1, 1]} : vector<8x32xf32> to vector<8x4xf32>
    %46 = vector.extract_strided_slice %11 {offsets = [0, 8], sizes = [8, 4], strides = [1, 1]} : vector<8x32xf32> to vector<8x4xf32>
    %cst_18 = arith.constant dense<0.000000e+00> : vector<8x8xf32>
    %47 = tpu.matmul %44, %45, %cst_18 {dimension_numbers = #tpu.dot_dimension_numbers<[1], [1], [0], [0], [0, 0, 1, 0], [], []>} : vector<8x4xf32>, vector<8x4xf32>, vector<8x8xf32> -> vector<8x8xf32>
    %cst_19 = arith.constant dense<0xFF800000> : vector<8xf32>
    %48 = vector.multi_reduction <maximumf>, %47, %cst_19 [1] : vector<8x8xf32> to vector<8xf32>
    %49 = vector.shape_cast %48 : vector<8xf32> to vector<8x1xf32>
    %50 = vector.broadcast %49 : vector<8x1xf32> to vector<8x8xf32>
    %51 = arith.subf %47, %50 : vector<8x8xf32>
    %52 = math.exp %51 : vector<8x8xf32>
    %cst_20 = arith.constant dense<0.000000e+00> : vector<8xf32>
    %53 = vector.multi_reduction <add>, %52, %cst_20 [1] : vector<8x8xf32> to vector<8xf32>
    %54 = vector.shape_cast %53 : vector<8xf32> to vector<8x1xf32>
    %55 = tpu.reciprocal %54 {approx = true} : vector<8x1xf32> -> vector<8x1xf32>
    %56 = vector.broadcast %55 : vector<8x1xf32> to vector<8x8xf32>
    %57 = arith.mulf %52, %56 : vector<8x8xf32>
    %cst_21 = arith.constant dense<0.000000e+00> : vector<8x4xf32>
    %58 = tpu.matmul %57, %46, %cst_21 {dimension_numbers = #tpu.dot_dimension_numbers<[1], [0], [0], [1], [0, 0, 1, 1], [], []>} : vector<8x8xf32>, vector<8x4xf32>, vector<8x4xf32> -> vector<8x4xf32>
    %c0_22 = arith.constant 0 : index
    %c8 = arith.constant 8 : index
    %59 = vector.load %arg7[%c0_22, %c8] : memref<8x32xf32, #tpu.memory_space<vmem>>, vector<8x4xf32>
    tpu.vector_store %arg7[%c0_22, %c8], %58 {strides = array<i32>} : memref<8x32xf32, #tpu.memory_space<vmem>>, vector<8x4xf32>,
    %60 = vector.extract_strided_slice %9 {offsets = [0, 12], sizes = [8, 4], strides = [1, 1]} : vector<8x32xf32> to vector<8x4xf32>
    %61 = vector.extract_strided_slice %10 {offsets = [0, 12], sizes = [8, 4], strides = [1, 1]} : vector<8x32xf32> to vector<8x4xf32>
    %62 = vector.extract_strided_slice %11 {offsets = [0, 12], sizes = [8, 4], strides = [1, 1]} : vector<8x32xf32> to vector<8x4xf32>
    %cst_23 = arith.constant dense<0.000000e+00> : vector<8x8xf32>
    %63 = tpu.matmul %60, %61, %cst_23 {dimension_numbers = #tpu.dot_dimension_numbers<[1], [1], [0], [0], [0, 0, 1, 0], [], []>} : vector<8x4xf32>, vector<8x4xf32>, vector<8x8xf32> -> vector<8x8xf32>
    %cst_24 = arith.constant dense<0xFF800000> : vector<8xf32>
    %64 = vector.multi_reduction <maximumf>, %63, %cst_24 [1] : vector<8x8xf32> to vector<8xf32>
    %65 = vector.shape_cast %64 : vector<8xf32> to vector<8x1xf32>
    %66 = vector.broadcast %65 : vector<8x1xf32> to vector<8x8xf32>
    %67 = arith.subf %63, %66 : vector<8x8xf32>
    %68 = math.exp %67 : vector<8x8xf32>
    %cst_25 = arith.constant dense<0.000000e+00> : vector<8xf32>
    %69 = vector.multi_reduction <add>, %68, %cst_25 [1] : vector<8x8xf32> to vector<8xf32>
    %70 = vector.shape_cast %69 : vector<8xf32> to vector<8x1xf32>
    %71 = tpu.reciprocal %70 {approx = true} : vector<8x1xf32> -> vector<8x1xf32>
    %72 = vector.broadcast %71 : vector<8x1xf32> to vector<8x8xf32>
    %73 = arith.mulf %68, %72 : vector<8x8xf32>
    %cst_26 = arith.constant dense<0.000000e+00> : vector<8x4xf32>
    %74 = tpu.matmul %73, %62, %cst_26 {dimension_numbers = #tpu.dot_dimension_numbers<[1], [0], [0], [1], [0, 0, 1, 1], [], []>} : vector<8x8xf32>, vector<8x4xf32>, vector<8x4xf32> -> vector<8x4xf32>
    %c0_27 = arith.constant 0 : index
    %c12 = arith.constant 12 : index
    %75 = vector.load %arg7[%c0_27, %c12] : memref<8x32xf32, #tpu.memory_space<vmem>>, vector<8x4xf32>
    tpu.vector_store %arg7[%c0_27, %c12], %74 {strides = array<i32>} : memref<8x32xf32, #tpu.memory_space<vmem>>, vector<8x4xf32>,
    %76 = vector.extract_strided_slice %9 {offsets = [0, 16], sizes = [8, 4], strides = [1, 1]} : vector<8x32xf32> to vector<8x4xf32>
    %77 = vector.extract_strided_slice %10 {offsets = [0, 16], sizes = [8, 4], strides = [1, 1]} : vector<8x32xf32> to vector<8x4xf32>
    %78 = vector.extract_strided_slice %11 {offsets = [0, 16], sizes = [8, 4], strides = [1, 1]} : vector<8x32xf32> to vector<8x4xf32>
    %cst_28 = arith.constant dense<0.000000e+00> : vector<8x8xf32>
    %79 = tpu.matmul %76, %77, %cst_28 {dimension_numbers = #tpu.dot_dimension_numbers<[1], [1], [0], [0], [0, 0, 1, 0], [], []>} : vector<8x4xf32>, vector<8x4xf32>, vector<8x8xf32> -> vector<8x8xf32>
    %cst_29 = arith.constant dense<0xFF800000> : vector<8xf32>
    %80 = vector.multi_reduction <maximumf>, %79, %cst_29 [1] : vector<8x8xf32> to vector<8xf32>
    %81 = vector.shape_cast %80 : vector<8xf32> to vector<8x1xf32>
    %82 = vector.broadcast %81 : vector<8x1xf32> to vector<8x8xf32>
    %83 = arith.subf %79, %82 : vector<8x8xf32>
    %84 = math.exp %83 : vector<8x8xf32>
    %cst_30 = arith.constant dense<0.000000e+00> : vector<8xf32>
    %85 = vector.multi_reduction <add>, %84, %cst_30 [1] : vector<8x8xf32> to vector<8xf32>
    %86 = vector.shape_cast %85 : vector<8xf32> to vector<8x1xf32>
    %87 = tpu.reciprocal %86 {approx = true} : vector<8x1xf32> -> vector<8x1xf32>
    %88 = vector.broadcast %87 : vector<8x1xf32> to vector<8x8xf32>
    %89 = arith.mulf %84, %88 : vector<8x8xf32>
    %cst_31 = arith.constant dense<0.000000e+00> : vector<8x4xf32>
    %90 = tpu.matmul %89, %78, %cst_31 {dimension_numbers = #tpu.dot_dimension_numbers<[1], [0], [0], [1], [0, 0, 1, 1], [], []>} : vector<8x8xf32>, vector<8x4xf32>, vector<8x4xf32> -> vector<8x4xf32>
    %c0_32 = arith.constant 0 : index
    %c16 = arith.constant 16 : index
    %91 = vector.load %arg7[%c0_32, %c16] : memref<8x32xf32, #tpu.memory_space<vmem>>, vector<8x4xf32>
    tpu.vector_store %arg7[%c0_32, %c16], %90 {strides = array<i32>} : memref<8x32xf32, #tpu.memory_space<vmem>>, vector<8x4xf32>,
    %92 = vector.extract_strided_slice %9 {offsets = [0, 20], sizes = [8, 4], strides = [1, 1]} : vector<8x32xf32> to vector<8x4xf32>
    %93 = vector.extract_strided_slice %10 {offsets = [0, 20], sizes = [8, 4], strides = [1, 1]} : vector<8x32xf32> to vector<8x4xf32>
    %94 = vector.extract_strided_slice %11 {offsets = [0, 20], sizes = [8, 4], strides = [1, 1]} : vector<8x32xf32> to vector<8x4xf32>
    %cst_33 = arith.constant dense<0.000000e+00> : vector<8x8xf32>
    %95 = tpu.matmul %92, %93, %cst_33 {dimension_numbers = #tpu.dot_dimension_numbers<[1], [1], [0], [0], [0, 0, 1, 0], [], []>} : vector<8x4xf32>, vector<8x4xf32>, vector<8x8xf32> -> vector<8x8xf32>
    %cst_34 = arith.constant dense<0xFF800000> : vector<8xf32>
    %96 = vector.multi_reduction <maximumf>, %95, %cst_34 [1] : vector<8x8xf32> to vector<8xf32>
    %97 = vector.shape_cast %96 : vector<8xf32> to vector<8x1xf32>
    %98 = vector.broadcast %97 : vector<8x1xf32> to vector<8x8xf32>
    %99 = arith.subf %95, %98 : vector<8x8xf32>
    %100 = math.exp %99 : vector<8x8xf32>
    %cst_35 = arith.constant dense<0.000000e+00> : vector<8xf32>
    %101 = vector.multi_reduction <add>, %100, %cst_35 [1] : vector<8x8xf32> to vector<8xf32>
    %102 = vector.shape_cast %101 : vector<8xf32> to vector<8x1xf32>
    %103 = tpu.reciprocal %102 {approx = true} : vector<8x1xf32> -> vector<8x1xf32>
    %104 = vector.broadcast %103 : vector<8x1xf32> to vector<8x8xf32>
    %105 = arith.mulf %100, %104 : vector<8x8xf32>
    %cst_36 = arith.constant dense<0.000000e+00> : vector<8x4xf32>
    %106 = tpu.matmul %105, %94, %cst_36 {dimension_numbers = #tpu.dot_dimension_numbers<[1], [0], [0], [1], [0, 0, 1, 1], [], []>} : vector<8x8xf32>, vector<8x4xf32>, vector<8x4xf32> -> vector<8x4xf32>
    %c0_37 = arith.constant 0 : index
    %c20 = arith.constant 20 : index
    %107 = vector.load %arg7[%c0_37, %c20] : memref<8x32xf32, #tpu.memory_space<vmem>>, vector<8x4xf32>
    tpu.vector_store %arg7[%c0_37, %c20], %106 {strides = array<i32>} : memref<8x32xf32, #tpu.memory_space<vmem>>, vector<8x4xf32>,
    %108 = vector.extract_strided_slice %9 {offsets = [0, 24], sizes = [8, 4], strides = [1, 1]} : vector<8x32xf32> to vector<8x4xf32>
    %109 = vector.extract_strided_slice %10 {offsets = [0, 24], sizes = [8, 4], strides = [1, 1]} : vector<8x32xf32> to vector<8x4xf32>
    %110 = vector.extract_strided_slice %11 {offsets = [0, 24], sizes = [8, 4], strides = [1, 1]} : vector<8x32xf32> to vector<8x4xf32>
    %cst_38 = arith.constant dense<0.000000e+00> : vector<8x8xf32>
    %111 = tpu.matmul %108, %109, %cst_38 {dimension_numbers = #tpu.dot_dimension_numbers<[1], [1], [0], [0], [0, 0, 1, 0], [], []>} : vector<8x4xf32>, vector<8x4xf32>, vector<8x8xf32> -> vector<8x8xf32>
    %cst_39 = arith.constant dense<0xFF800000> : vector<8xf32>
    %112 = vector.multi_reduction <maximumf>, %111, %cst_39 [1] : vector<8x8xf32> to vector<8xf32>
    %113 = vector.shape_cast %112 : vector<8xf32> to vector<8x1xf32>
    %114 = vector.broadcast %113 : vector<8x1xf32> to vector<8x8xf32>
    %115 = arith.subf %111, %114 : vector<8x8xf32>
    %116 = math.exp %115 : vector<8x8xf32>
    %cst_40 = arith.constant dense<0.000000e+00> : vector<8xf32>
    %117 = vector.multi_reduction <add>, %116, %cst_40 [1] : vector<8x8xf32> to vector<8xf32>
    %118 = vector.shape_cast %117 : vector<8xf32> to vector<8x1xf32>
    %119 = tpu.reciprocal %118 {approx = true} : vector<8x1xf32> -> vector<8x1xf32>
    %120 = vector.broadcast %119 : vector<8x1xf32> to vector<8x8xf32>
    %121 = arith.mulf %116, %120 : vector<8x8xf32>
    %cst_41 = arith.constant dense<0.000000e+00> : vector<8x4xf32>
    %122 = tpu.matmul %121, %110, %cst_41 {dimension_numbers = #tpu.dot_dimension_numbers<[1], [0], [0], [1], [0, 0, 1, 1], [], []>} : vector<8x8xf32>, vector<8x4xf32>, vector<8x4xf32> -> vector<8x4xf32>
    %c0_42 = arith.constant 0 : index
    %c24 = arith.constant 24 : index
    %123 = vector.load %arg7[%c0_42, %c24] : memref<8x32xf32, #tpu.memory_space<vmem>>, vector<8x4xf32>
    tpu.vector_store %arg7[%c0_42, %c24], %122 {strides = array<i32>} : memref<8x32xf32, #tpu.memory_space<vmem>>, vector<8x4xf32>,
    %124 = vector.extract_strided_slice %9 {offsets = [0, 28], sizes = [8, 4], strides = [1, 1]} : vector<8x32xf32> to vector<8x4xf32>
    %125 = vector.extract_strided_slice %10 {offsets = [0, 28], sizes = [8, 4], strides = [1, 1]} : vector<8x32xf32> to vector<8x4xf32>
    %126 = vector.extract_strided_slice %11 {offsets = [0, 28], sizes = [8, 4], strides = [1, 1]} : vector<8x32xf32> to vector<8x4xf32>
    %cst_43 = arith.constant dense<0.000000e+00> : vector<8x8xf32>
    %127 = tpu.matmul %124, %125, %cst_43 {dimension_numbers = #tpu.dot_dimension_numbers<[1], [1], [0], [0], [0, 0, 1, 0], [], []>} : vector<8x4xf32>, vector<8x4xf32>, vector<8x8xf32> -> vector<8x8xf32>
    %cst_44 = arith.constant dense<0xFF800000> : vector<8xf32>
    %128 = vector.multi_reduction <maximumf>, %127, %cst_44 [1] : vector<8x8xf32> to vector<8xf32>
    %129 = vector.shape_cast %128 : vector<8xf32> to vector<8x1xf32>
    %130 = vector.broadcast %129 : vector<8x1xf32> to vector<8x8xf32>
    %131 = arith.subf %127, %130 : vector<8x8xf32>
    %132 = math.exp %131 : vector<8x8xf32>
    %cst_45 = arith.constant dense<0.000000e+00> : vector<8xf32>
    %133 = vector.multi_reduction <add>, %132, %cst_45 [1] : vector<8x8xf32> to vector<8xf32>
    %134 = vector.shape_cast %133 : vector<8xf32> to vector<8x1xf32>
    %135 = tpu.reciprocal %134 {approx = true} : vector<8x1xf32> -> vector<8x1xf32>
    %136 = vector.broadcast %135 : vector<8x1xf32> to vector<8x8xf32>
    %137 = arith.mulf %132, %136 : vector<8x8xf32>
    %cst_46 = arith.constant dense<0.000000e+00> : vector<8x4xf32>
    %138 = tpu.matmul %137, %126, %cst_46 {dimension_numbers = #tpu.dot_dimension_numbers<[1], [0], [0], [1], [0, 0, 1, 1], [], []>} : vector<8x8xf32>, vector<8x4xf32>, vector<8x4xf32> -> vector<8x4xf32>
    %c0_47 = arith.constant 0 : index
    %c28 = arith.constant 28 : index
    %139 = vector.load %arg7[%c0_47, %c28] : memref<8x32xf32, #tpu.memory_space<vmem>>, vector<8x4xf32>
    tpu.vector_store %arg7[%c0_47, %c28], %138 {strides = array<i32>} : memref<8x32xf32, #tpu.memory_space<vmem>>, vector<8x4xf32>,
    %c0_48 = arith.constant 0 : index
    %c0_49 = arith.constant 0 : index
    %140 = vector.load %arg7[%c0_48, %c0_49] : memref<8x32xf32, #tpu.memory_space<vmem>>, vector<8x32xf32>
    %c0_50 = arith.constant 0 : index
    %c0_51 = arith.constant 0 : index
    %141 = vector.load %arg4[%c0_50, %c0_51] : memref<32x32xf32, #tpu.memory_space<vmem>>, vector<32x32xf32>
    %cst_52 = arith.constant dense<0.000000e+00> : vector<8x32xf32>
    %142 = tpu.matmul %140, %141, %cst_52 {dimension_numbers = #tpu.dot_dimension_numbers<[1], [0], [0], [1], [0, 0, 1, 1], [], []>} : vector<8x32xf32>, vector<32x32xf32>, vector<8x32xf32> -> vector<8x32xf32>
    %c0_53 = arith.constant 0 : index
    %c0_54 = arith.constant 0 : index
    %143 = vector.load %arg5[%c0_53, %c0_54] : memref<1x32xf32, #tpu.memory_space<vmem>>, vector<1x32xf32>
    %144 = vector.broadcast %143 : vector<1x32xf32> to vector<8x32xf32>
    %145 = arith.addf %142, %144 : vector<8x32xf32>
    %c0_55 = arith.constant 0 : index
    %c0_56 = arith.constant 0 : index
    %c0_57 = arith.constant 0 : index
    %146 = vector.load %arg6[%c0_55, %c0_56, %c0_57] : memref<1x8x32xf32, #tpu.memory_space<vmem>>, vector<1x8x32xf32>
    %147 = vector.shape_cast %146 : vector<1x8x32xf32> to vector<8x32xf32>
    %148 = vector.shape_cast %145 : vector<8x32xf32> to vector<1x8x32xf32>
    tpu.vector_store %arg6[%c0_55, %c0_56, %c0_57], %148 {strides = array<i32>} : memref<1x8x32xf32, #tpu.memory_space<vmem>>, vector<1x8x32xf32>,
    return
  }
  func.func @transform_0(%arg0: i32) -> (i32, i32, i32) {
    %c0_i32 = arith.constant 0 : i32
    %c0_i32_0 = arith.constant 0 : i32
    %c0_i32_1 = arith.constant 0 : i32
    return %arg0, %c0_i32, %c0_i32_0 : i32, i32, i32
  }
  func.func @transform_1(%arg0: i32) -> (i32, i32) {
    %c0_i32 = arith.constant 0 : i32
    %c0_i32_0 = arith.constant 0 : i32
    %c0_i32_1 = arith.constant 0 : i32
    return %c0_i32, %c0_i32_0 : i32, i32
  }
  func.func @transform_2(%arg0: i32) -> (i32, i32) {
    %c0_i32 = arith.constant 0 : i32
    %c0_i32_0 = arith.constant 0 : i32
    %c0_i32_1 = arith.constant 0 : i32
    return %c0_i32, %c0_i32_0 : i32, i32
  }
  func.func @transform_3(%arg0: i32) -> (i32, i32) {
    %c0_i32 = arith.constant 0 : i32
    %c0_i32_0 = arith.constant 0 : i32
    %c0_i32_1 = arith.constant 0 : i32
    return %c0_i32, %c0_i32_0 : i32, i32
  }
  func.func @transform_4(%arg0: i32) -> (i32, i32) {
    %c0_i32 = arith.constant 0 : i32
    %c0_i32_0 = arith.constant 0 : i32
    %c0_i32_1 = arith.constant 0 : i32
    return %c0_i32, %c0_i32_0 : i32, i32
  }
  func.func @transform_5(%arg0: i32) -> (i32, i32, i32) {
    %c0_i32 = arith.constant 0 : i32
    %c0_i32_0 = arith.constant 0 : i32
    %c0_i32_1 = arith.constant 0 : i32
    return %arg0, %c0_i32, %c0_i32_0 : i32, i32, i32
  }
}

</mosaic_0001>

<llo_original>
// kernel: gated_attention_forward.1
$region0: #{gated_attention_forward.1}
  #allocation0 [shape = 'u32[]', space=smem, size = 0x4, offset = 0x4, fixed_abs, tag = 'smem constant byte address 0x4 - core index']
  #allocation1 [shape = 'u32[144,128]{1,0:T(1,128)}', space=vmem, size = 0x12000, scoped, tag = 'internal scratch']
  #allocation2 [shape = 'f32[8,32]{1,0:T(8,128)}', space=vmem, size = 0x1000, scoped, tag = 'scratch operand']
  %s0 = inlined_call_operand.hbm [shape: f32[2,8,32], index: 0, kind: input, shape index: {}]
  %s1 = inlined_call_operand.hbm [shape: f32[32,96], index: 1, kind: input, shape index: {}]
  %s2 = inlined_call_operand.vmem [shape: f32[1,96], index: 2, kind: input, shape index: {}]
  %s3 = inlined_call_operand.hbm [shape: f32[32,32], index: 3, kind: input, shape index: {}]
  %s4 = inlined_call_operand.vmem [shape: f32[1,32], index: 4, kind: input, shape index: {}]
  %s5 = inlined_call_operand.hbm [shape: f32[2,8,32], index: 5, kind: output, shape index: {}]
  %s6 = sld [smem:[#allocation0]]
  $region65: #{gated_attention_forward.1} parent=0
    _
  %s8 = ssub.s32 1, %s6
  %s9 = scalar_select 0, %s8, %s6
  $region1: #{gated_attention_forward.1} parent=0
    #allocation3 [shape = 'u8[8192]{0}', space=vmem, size = 0x2000, scoped, tag = 'input window, operand 0']
    #allocation4 [shape = 's32[2]{0}', space=sflag, size = 0x8, scoped, tag = 'scoped memory for gated_attention_forward.1']
    #allocation5 [shape = 's32[2]{0}', space=sflag, size = 0x8, scoped, tag = 'scoped memory for gated_attention_forward.1']
    #allocation6 [shape = 'u8[16384]{0}', space=vmem, size = 0x4000, scoped, tag = 'input window, operand 1, single buffered']
    #allocation7 [shape = 's32[1]{0}', space=sflag, size = 0x4, scoped, tag = 'scoped memory for gated_attention_forward.1']
    #allocation8 [shape = 'u8[16384]{0}', space=vmem, size = 0x4000, scoped, tag = 'input window, operand 3, single buffered']
    #allocation9 [shape = 'u8[8192]{0}', space=vmem, size = 0x2000, scoped, tag = 'output window, operand 0']
    %10 = vsyncpa [#allocation4], 0
    %s11 = scalar_lea.sflag [#allocation4], 1
    %12 = vsyncpa %s11, 0
    %13 = vsyncpa [#allocation7], 0
    %14 = vsyncpa [#allocation5], 0
    %s15 = scalar_lea.sflag [#allocation5], 1
    %16 = vsyncpa %s15, 0
    loop: start=0, step=1, limit=4
    $region2: #{gated_attention_forward.1} parent=1 // loop_pre_header
      _
    $region3: #{gated_attention_forward.1} parent=1 // loop_header
      %s18 = sphi 0, %s22
      %p19 = scmp.ge.s32.totalorder %s18, 4
      %s28 = sphi 0, %s30
      %s31 = sphi 0, %s28
      %s32 = sphi 0, %s31
      %s48 = sphi 0, %s32
      %s52 = sphi 0, %s52
      %s54 = sphi 0, %s52
      %s55 = sphi 0, %s54
      %s69 = sphi 0, %s55
      %s73 = sphi 0, %s73
      %s75 = sphi 0, %s73
      %s76 = sphi 0, %s75
      %s90 = sphi 0, %s76
      %s94 = sphi 0, %s94
      %s96 = sphi 0, %s94
      %s97 = sphi 0, %s96
      %s111 = sphi 0, %s97
      %s115 = sphi 0, %s115
      %s117 = sphi 0, %s115
      %s118 = sphi 0, %s117
      %s132 = sphi 0, %s118
      %s138 = sphi 0, %s140
      %s141 = sphi 0, %s138
      %s142 = sphi 0, %s141
      %s158 = sphi 0, %s142
    $region4: #{gated_attention_forward.1} parent=1 // loop_header_branch
      %21 = sbr.rel (%p19) target = $region8
    $region5: #{gated_attention_forward.1} parent=1 // loop_body
      %s23 = ssub.s32 %s18, 1
      %s24 = ssub.s32 %s18, 2
      %s25 = sadd.s32 %s18, 1
      %s26 = ssub.s32 %s18, %s25
      %p27 = scmp.eq.s32.totalorder %s26, 0
      %s29 = sadd.s32 %s28, 1
      %s30 = scalar_select %p27, %s28, %s29
      %p33 = pneg %p27
      %p34 = scmp.eq.s32.totalorder %s18, 1
      %p35 = por %p33, %p34
      %p36 = scmp.ne.s32.totalorder %s28, %s31
      %p37 = scmp.eq.s32.totalorder %s18, 0
      %p38 = por %p36, %p37
      %p39 = scmp.ne.s32.totalorder %s28, %s31
      %p40 = scmp.eq.s32.totalorder %s23, 1
      %p41 = por %p39, %p40
      %p42 = scmp.ne.s32.totalorder %s31, %s32
      %p43 = scmp.eq.s32.totalorder %s23, 0
      %p44 = por %p42, %p43
      %p45 = scmp.ne.s32.totalorder %s31, %s32
      %p46 = scmp.eq.s32.totalorder %s24, 1
      %p47 = por %p45, %p46
      %p49 = scmp.ne.s32.totalorder %s32, %s48
      %p50 = scmp.eq.s32.totalorder %s24, 0
      %p51 = por %p49, %p50
      %s53 = sadd.s32 %s52, 1
      %p56 = scmp.eq.s32.totalorder %s18, 1
      %p57 = scmp.ne.s32.totalorder %s52, %s54
      %p58 = scmp.eq.s32.totalorder %s18, 0
      %p59 = por %p57, %p58
      %p60 = scmp.ne.s32.totalorder %s52, %s54
      %p61 = scmp.eq.s32.totalorder %s23, 1
      %p62 = por %p60, %p61
      %p63 = scmp.ne.s32.totalorder %s54, %s55
      %p64 = scmp.eq.s32.totalorder %s23, 0
      %p65 = por %p63, %p64
      %p66 = scmp.ne.s32.totalorder %s54, %s55
      %p67 = scmp.eq.s32.totalorder %s24, 1
      %p68 = por %p66, %p67
      %p70 = scmp.ne.s32.totalorder %s55, %s69
      %p71 = scmp.eq.s32.totalorder %s24, 0
      %p72 = por %p70, %p71
      %s74 = sadd.s32 %s73, 1
      %p77 = scmp.eq.s32.totalorder %s18, 1
      %p78 = scmp.ne.s32.totalorder %s73, %s75
      %p79 = scmp.eq.s32.totalorder %s18, 0
      %p80 = por %p78, %p79
      %p81 = scmp.ne.s32.totalorder %s73, %s75
      %p82 = scmp.eq.s32.totalorder %s23, 1
      %p83 = por %p81, %p82
      %p84 = scmp.ne.s32.totalorder %s75, %s76
      %p85 = scmp.eq.s32.totalorder %s23, 0
      %p86 = por %p84, %p85
      %p87 = scmp.ne.s32.totalorder %s75, %s76
      %p88 = scmp.eq.s32.totalorder %s24, 1
      %p89 = por %p87, %p88
      %p91 = scmp.ne.s32.totalorder %s76, %s90
      %p92 = scmp.eq.s32.totalorder %s24, 0
      %p93 = por %p91, %p92
      %s95 = sadd.s32 %s94, 1
      %p98 = scmp.eq.s32.totalorder %s18, 1
      %p99 = scmp.ne.s32.totalorder %s94, %s96
      %p100 = scmp.eq.s32.totalorder %s18, 0
      %p101 = por %p99, %p100
      %p102 = scmp.ne.s32.totalorder %s94, %s96
      %p103 = scmp.eq.s32.totalorder %s23, 1
      %p104 = por %p102, %p103
      %p105 = scmp.ne.s32.totalorder %s96, %s97
      %p106 = scmp.eq.s32.totalorder %s23, 0
      %p107 = por %p105, %p106
      %p108 = scmp.ne.s32.totalorder %s96, %s97
      %p109 = scmp.eq.s32.totalorder %s24, 1
      %p110 = por %p108, %p109
      %p112 = scmp.ne.s32.totalorder %s97, %s111
      %p113 = scmp.eq.s32.totalorder %s24, 0
      %p114 = por %p112, %p113
      %s116 = sadd.s32 %s115, 1
      %p119 = scmp.eq.s32.totalorder %s18, 1
      %p120 = scmp.ne.s32.totalorder %s115, %s117
      %p121 = scmp.eq.s32.totalorder %s18, 0
      %p122 = por %p120, %p121
      %p123 = scmp.ne.s32.totalorder %s115, %s117
      %p124 = scmp.eq.s32.totalorder %s23, 1
      %p125 = por %p123, %p124
      %p126 = scmp.ne.s32.totalorder %s117, %s118
      %p127 = scmp.eq.s32.totalorder %s23, 0
      %p128 = por %p126, %p127
      %p129 = scmp.ne.s32.totalorder %s117, %s118
      %p130 = scmp.eq.s32.totalorder %s24, 1
      %p131 = por %p129, %p130
      %p133 = scmp.ne.s32.totalorder %s118, %s132
      %p134 = scmp.eq.s32.totalorder %s24, 0
      %p135 = por %p133, %p134
      %s136 = ssub.s32 %s18, %s25
      %p137 = scmp.eq.s32.totalorder %s136, 0
      %s139 = sadd.s32 %s138, 1
      %s140 = scalar_select %p137, %s138, %s139
      %p143 = pneg %p137
      %p144 = scmp.eq.s32.totalorder %s18, 1
      %p145 = por %p143, %p144
      %p146 = scmp.ne.s32.totalorder %s138, %s141
      %p147 = scmp.eq.s32.totalorder %s18, 0
      %p148 = por %p146, %p147
      %p149 = scmp.ne.s32.totalorder %s138, %s141
      %p150 = scmp.eq.s32.totalorder %s23, 1
      %p151 = por %p149, %p150
      %p152 = scmp.ne.s32.totalorder %s141, %s142
      %p153 = scmp.eq.s32.totalorder %s23, 0
      %p154 = por %p152, %p153
      %p155 = scmp.ne.s32.totalorder %s141, %s142
      %p156 = scmp.eq.s32.totalorder %s24, 1
      %p157 = por %p155, %p156
      %p159 = scmp.ne.s32.totalorder %s142, %s158
      %p160 = scmp.eq.s32.totalorder %s24, 0
      %p161 = por %p159, %p160
      %p162 = scmp.le.s32.totalorder 1, %s18
      %p163 = scmp.lt.s32.totalorder %s18, 3
      %p164 = pnand %p162, %p163
      %p165 = pneg %p164
      // Predicated region
      $region9: #{gated_attention_forward.1} parent=5 // pred_check
        _
      $region10: #{gated_attention_forward.1} parent=5 // pred_check_branch
        %167 = sbr.rel (%p164) target = $region12
      $region11: #{gated_attention_forward.1} parent=5 // pred_region
        %s168 = ssub.s32 %s18, 1
        // Predicated region
        $region13: #{gated_attention_forward.1} parent=11 // pred_check
          %p169 = pneg %p65
        $region14: #{gated_attention_forward.1} parent=11 // pred_check_branch
          %171 = sbr.rel (%p169) target = $region16
        $region15: #{gated_attention_forward.1} parent=11 // pred_region
          %s173 = ssub.s32 512, 512
          %174 = vsyncadd [#allocation7], %s173
          %s175 = sshll.u32 [#allocation6], 4
          %s176 = int_to_ptr.vmem [resolvable:$true] %s175
          %181 = dma.hbm_to_vmem [thread:$0]  %s1, 512, %s176, [#allocation7], 128, 128, 8
        $region16: #{gated_attention_forward.1} parent=11 // pred_fallthru
          _
        // Predicated region
        $region17: #{gated_attention_forward.1} parent=11 // pred_check
          %p182 = pneg %p86
        $region18: #{gated_attention_forward.1} parent=11 // pred_check_branch
          %184 = sbr.rel (%p182) target = $region20
        $region19: #{gated_attention_forward.1} parent=11 // pred_region
          _
        $region20: #{gated_attention_forward.1} parent=11 // pred_fallthru
          _
        // Predicated region
        $region21: #{gated_attention_forward.1} parent=11 // pred_check
          %p185 = pneg %p107
        $region22: #{gated_attention_forward.1} parent=11 // pred_check_branch
          %187 = sbr.rel (%p185) target = $region24
        $region23: #{gated_attention_forward.1} parent=11 // pred_region
          %s189 = ssub.s32 512, 512
          %190 = vsyncadd [#allocation7], %s189
          %s191 = sshll.u32 [#allocation8], 4
          %s192 = int_to_ptr.vmem [resolvable:$true] %s191
          %197 = dma.hbm_to_vmem [thread:$0]  %s3, 512, %s192, [#allocation7], 128, 128, 8
        $region24: #{gated_attention_forward.1} parent=11 // pred_fallthru
          _
        // Predicated region
        $region25: #{gated_attention_forward.1} parent=11 // pred_check
          %p198 = pneg %p128
        $region26: #{gated_attention_forward.1} parent=11 // pred_check_branch
          %200 = sbr.rel (%p198) target = $region28
        $region27: #{gated_attention_forward.1} parent=11 // pred_region
          _
        $region28: #{gated_attention_forward.1} parent=11 // pred_fallthru
          _
      $region12: #{gated_attention_forward.1} parent=5 // pred_fallthru
        _
      %p201 = scmp.lt.s32.totalorder %s18, 2
      // Predicated region
      $region29: #{gated_attention_forward.1} parent=5 // pred_check
        %p202 = pneg %p201
      $region30: #{gated_attention_forward.1} parent=5 // pred_check_branch
        %204 = sbr.rel (%p202) target = $region32
      $region31: #{gated_attention_forward.1} parent=5 // pred_region
        // Predicated region
        $region33: #{gated_attention_forward.1} parent=31 // pred_check
          %p205 = pneg %p38
        $region34: #{gated_attention_forward.1} parent=31 // pred_check_branch
          %207 = sbr.rel (%p205) target = $region36
        $region35: #{gated_attention_forward.1} parent=31 // pred_region
          %s208 = sand.u32 %s28, 1
          %s209 = scalar_lea.sflag [#allocation4], %s208
          %s210 = sand.u32 %s28, 1
          %s211 = smul.addr %s210, 8
          %s212 = scalar_lea.vmem [#allocation3], %s211
          %s214 = ssub.s32 128, 128
          %215 = vsyncadd %s209, %s214
          %s216 = smul.addr %s18, 128
          %s217 = scalar_lea.hbm %s0, %s216
          %s219 = sshll.u32 %s212, 4
          %s220 = int_to_ptr.vmem [resolvable:$true] %s219
          %222 = dma.hbm_to_vmem [thread:$0]  %s217, 128, %s220, %s209
        $region36: #{gated_attention_forward.1} parent=31 // pred_fallthru
          _
      $region32: #{gated_attention_forward.1} parent=5 // pred_fallthru
        _
      %p223 = scmp.le.s32.totalorder 1, %s18
      %p224 = scmp.lt.s32.totalorder %s18, 3
      %p225 = pnand %p223, %p224
      %p226 = pneg %p225
      // Predicated region
      $region37: #{gated_attention_forward.1} parent=5 // pred_check
        _
      $region38: #{gated_attention_forward.1} parent=5 // pred_check_branch
        %228 = sbr.rel (%p225) target = $region40
      $region39: #{gated_attention_forward.1} parent=5 // pred_region
        %s229 = ssub.s32 %s18, 1
        %s230 = sand.u32 %s31, 1
        %s231 = scalar_lea.sflag [#allocation4], %s230
        %s232 = sand.u32 %s31, 1
        %s233 = smul.addr %s232, 8
        %s234 = scalar_lea.vmem [#allocation3], %s233
        // Predicated region
        $region41: #{gated_attention_forward.1} parent=39 // pred_check
          %p235 = pneg %p44
        $region42: #{gated_attention_forward.1} parent=39 // pred_check_branch
          %237 = sbr.rel (%p235) target = $region44
        $region43: #{gated_attention_forward.1} parent=39 // pred_region
          %238 = dma.done %s231, 128
        $region44: #{gated_attention_forward.1} parent=39 // pred_fallthru
          _
        // Predicated region
        $region45: #{gated_attention_forward.1} parent=39 // pred_check
          %p239 = pneg %p65
        $region46: #{gated_attention_forward.1} parent=39 // pred_check_branch
          %241 = sbr.rel (%p239) target = $region48
        $region47: #{gated_attention_forward.1} parent=39 // pred_region
          %242 = dma.done [#allocation7], 512
        $region48: #{gated_attention_forward.1} parent=39 // pred_fallthru
          _
        // Predicated region
        $region49: #{gated_attention_forward.1} parent=39 // pred_check
          %p243 = pneg %p107
        $region50: #{gated_attention_forward.1} parent=39 // pred_check_branch
          %245 = sbr.rel (%p243) target = $region52
        $region51: #{gated_attention_forward.1} parent=39 // pred_region
          %246 = dma.done [#allocation7], 512
        $region52: #{gated_attention_forward.1} parent=39 // pred_fallthru
          _
        %s247 = sand.u32 %s31, 1
        %s248 = scalar_lea.sflag [#allocation4], %s247
        %s249 = sand.u32 %s31, 1
        %s250 = smul.addr %s249, 8
        %s251 = scalar_lea.vmem [#allocation3], %s250
        %p252 = pneg %p44
        %p253 = pneg %p41
        %p254 = pneg %p65
        %p255 = pneg %p62
        %p256 = pneg %p86
        %p257 = pneg %p83
        %p258 = pneg %p107
        %p259 = pneg %p104
        %p260 = pneg %p128
        %p261 = pneg %p125
        %p262 = pneg %p154
        %p263 = pneg %p151
        %s264 = sand.u32 %s141, 1
        %s265 = scalar_lea.sflag [#allocation5], %s264
        %s266 = sand.u32 %s141, 1
        %s267 = smul.addr %s266, 8
        %s268 = scalar_lea.vmem [#allocation9], %s267
        %v269 = vld [vmem:[%s234] sm:$0xff]
        %v270 = vld [vmem:[#allocation6] sm:$0xff]
        %v271 = vld [vmem:[#allocation6 + $0x8] sm:$0xff]
        %v272 = vld [vmem:[#allocation6 + $0x10] sm:$0xff]
        %v273 = vld [vmem:[#allocation6 + $0x18] sm:$0xff]
        %v274 = vld [vmem:[%s2] sm:$0x1]
        %v276 = vlaneseq
        %v277 = vshrl.u32 %v276, 7
        %v278 = vsub.s32 0, %v277
        %v279 = vrot.slane %v274, %v278
        %vm281 = vcmask 261120
        %v283 = vsel %vm281, %v269, 0
        %285 = vmatprep.subr.mxu0 0.0
        %286 = vmatpush1.msra.mxu0 0.0
        %287 = vmatprep.subr.mxu0 0.0
        %288 = vmatpush1.msra.mxu0 0.0
        %289 = vmatprep.subr.mxu0 0.0
        %290 = vmatpush1.msra.mxu0 0.0
        %291 = vmatprep.subr.mxu0 0.0
        %292 = vmatpush1.msra.mxu0 0.0
        %293 = vmatprep.subr.mxu0 0.0
        %294 = vmatpush1.msra.mxu0 0.0
        %295 = vmatprep.subr.mxu0 0.0
        %296 = vmatpush1.msra.mxu0 0.0
        %297 = vmatprep.subr.mxu0 0.0
        %298 = vmatpush1.msra.mxu0 0.0
        %299 = vmatprep.subr.mxu0 0.0
        %300 = vmatpush1.msra.mxu0 0.0
        %301 = vmatprep.subr.mxu0 0.0
        %302 = vmatpush1.msra.mxu0 0.0
        %303 = vmatprep.subr.mxu0 0.0
        %304 = vmatpush1.msra.mxu0 0.0
        %305 = vmatprep.subr.mxu0 0.0
        %306 = vmatpush1.msra.mxu0 0.0
        %307 = vmatprep.subr.mxu0 0.0
        %308 = vmatpush1.msra.mxu0 0.0
        %309 = vmatprep.subr.mxu0 0.0
        %310 = vmatpush1.msra.mxu0 %v273
        %311 = vmatprep.subr.mxu0 0.0
        %312 = vmatpush1.msra.mxu0 %v272
        %313 = vmatprep.subr.mxu0 0.0
        %314 = vmatpush1.msra.mxu0 %v271
        %315 = vmatprep.subr.mxu0 0.0
        %316 = vmatpush1.msra.mxu0 %v270
        %317 = vmatprep.subr.mxu0 0.0
        %318 = vmatpush2.msra.mxu0 0.0
        %319 = vmatprep.subr.mxu0 0.0
        %320 = vmatpush2.msra.mxu0 0.0
        %321 = vmatprep.subr.mxu0 0.0
        %322 = vmatpush2.msra.mxu0 0.0
        %323 = vmatprep.subr.mxu0 0.0
        %324 = vmatpush2.msra.mxu0 0.0
        %325 = vmatprep.subr.mxu0 0.0
        %326 = vmatpush2.msra.mxu0 0.0
        %327 = vmatprep.subr.mxu0 0.0
        %328 = vmatpush2.msra.mxu0 0.0
        %329 = vmatprep.subr.mxu0 0.0
        %330 = vmatpush2.msra.mxu0 0.0
        %331 = vmatprep.subr.mxu0 0.0
        %332 = vmatpush2.msra.mxu0 0.0
        %333 = vmatprep.subr.mxu0 0.0
        %334 = vmatpush2.msra.mxu0 0.0
        %335 = vmatprep.subr.mxu0 0.0
        %336 = vmatpush2.msra.mxu0 0.0
        %337 = vmatprep.subr.mxu0 0.0
        %338 = vmatpush2.msra.mxu0 0.0
        %339 = vmatprep.subr.mxu0 0.0
        %340 = vmatpush2.msra.mxu0 0.0
        %341 = vmatprep.subr.mxu0 0.0
        %342 = vmatpush2.msra.mxu0 0.0
        %343 = vmatprep.subr.mxu0 0.0
        %344 = vmatpush2.msra.mxu0 0.0
        %345 = vmatprep.subr.mxu0 0.0
        %346 = vmatpush2.msra.mxu0 0.0
        %347 = vmatprep.subr.mxu0 0.0
        %348 = vmatpush2.msra.mxu0 0.0
        %349 = vmatprep.mubr.f32.mxu0 0.0
        %350 = vmatmul.mubr.f32.gmra.mxu0 %v283
        %v351 = vpop.f32.mrf.mxu0
        %v352 = vadd.f32 %v279, %v351
        %v353 = vpop.f32.mrf.mxu0
        %354 = vdwg.mxu0
        %v355 = vmul.f32 %v352, 0.5
        %357 = vrot.lane.b32.xlu0 %v352, 96
        %v358 = vpop.permute.xlu0 %357
        %vm359 = vcmask 31744
        %v361 = vsel %vm359, %v355, 0
        %v363 = vsel %vm359, %v358, 0
        %365 = vmatprep.subr.mxu0 0.0
        %366 = vmatpush1.xpose.msra.mxu0 0.0
        %367 = vmatprep.subr.mxu0 0.0
        %368 = vmatpush1.xpose.msra.mxu0 0.0
        %369 = vmatprep.subr.mxu0 0.0
        %370 = vmatpush1.xpose.msra.mxu0 0.0
        %371 = vmatprep.subr.mxu0 0.0
        %372 = vmatpush1.xpose.msra.mxu0 0.0
        %373 = vmatprep.subr.mxu0 0.0
        %374 = vmatpush1.xpose.msra.mxu0 0.0
        %375 = vmatprep.subr.mxu0 0.0
        %376 = vmatpush1.xpose.msra.mxu0 0.0
        %377 = vmatprep.subr.mxu0 0.0
        %378 = vmatpush1.xpose.msra.mxu0 0.0
        %379 = vmatprep.subr.mxu0 0.0
        %380 = vmatpush1.xpose.msra.mxu0 0.0
        %381 = vmatprep.subr.mxu0 0.0
        %382 = vmatpush1.xpose.msra.mxu0 0.0
        %383 = vmatprep.subr.mxu0 0.0
        %384 = vmatpush1.xpose.msra.mxu0 0.0
        %385 = vmatprep.subr.mxu0 0.0
        %386 = vmatpush1.xpose.msra.mxu0 0.0
        %387 = vmatprep.subr.mxu0 0.0
        %388 = vmatpush1.xpose.msra.mxu0 0.0
        %389 = vmatprep.subr.mxu0 0.0
        %390 = vmatpush1.xpose.msra.mxu0 0.0
        %391 = vmatprep.subr.mxu0 0.0
        %392 = vmatpush1.xpose.msra.mxu0 0.0
        %393 = vmatprep.subr.mxu0 0.0
        %394 = vmatpush1.xpose.msra.mxu0 0.0
        %395 = vmatprep.subr.mxu0 0.0
        %396 = vmatpush1.xpose.msra.mxu0 %v363
        %397 = vmatprep.subr.mxu0 0.0
        %398 = vmatpush2.xpose.msra.mxu0 0.0
        %399 = vmatprep.subr.mxu0 0.0
        %400 = vmatpush2.xpose.msra.mxu0 0.0
        %401 = vmatprep.subr.mxu0 0.0
        %402 = vmatpush2.xpose.msra.mxu0 0.0
        %403 = vmatprep.subr.mxu0 0.0
        %404 = vmatpush2.xpose.msra.mxu0 0.0
        %405 = vmatprep.subr.mxu0 0.0
        %406 = vmatpush2.xpose.msra.mxu0 0.0
        %407 = vmatprep.subr.mxu0 0.0
        %408 = vmatpush2.xpose.msra.mxu0 0.0
        %409 = vmatprep.subr.mxu0 0.0
        %410 = vmatpush2.xpose.msra.mxu0 0.0
        %411 = vmatprep.subr.mxu0 0.0
        %412 = vmatpush2.xpose.msra.mxu0 0.0
        %413 = vmatprep.subr.mxu0 0.0
        %414 = vmatpush2.xpose.msra.mxu0 0.0
        %415 = vmatprep.subr.mxu0 0.0
        %416 = vmatpush2.xpose.msra.mxu0 0.0
        %417 = vmatprep.subr.mxu0 0.0
        %418 = vmatpush2.xpose.msra.mxu0 0.0
        %419 = vmatprep.subr.mxu0 0.0
        %420 = vmatpush2.xpose.msra.mxu0 0.0
        %421 = vmatprep.subr.mxu0 0.0
        %422 = vmatpush2.xpose.msra.mxu0 0.0
        %423 = vmatprep.subr.mxu0 0.0
        %424 = vmatpush2.xpose.msra.mxu0 0.0
        %425 = vmatprep.subr.mxu0 0.0
        %426 = vmatpush2.xpose.msra.mxu0 0.0
        %427 = vmatprep.subr.mxu0 0.0
        %428 = vmatpush2.xpose.msra.mxu0 0.0
        %429 = vmatprep.mubr.f32.mxu0 0.0
        %430 = vmatmul.mubr.f32.gmra.mxu0 %v361
        %v431 = vpop.f32.mrf.mxu0
        %v432 = vadd.f32 0.0, %v431
        %v433 = vpop.f32.mrf.mxu0
        %434 = vdwg.mxu0
        %vm435 = vcmask 64512
        %v436 = vsel %vm435, %v432, -inf
        %437 = vmax.xlane.f32.xlu0 %v436
        %v438 = vpop.xlane.xlu0 %437
        %v439 = vsub.f32 %v432, %v438
        %v440 = vmul.f32 %v439, 1.442695
        %v441 = vpow.pop %v440
        %v442 = vsel %vm435, %v441, 0.0
        %443 = vadd.xlane.f32.xlu0 %v442
        %v444 = vpop.xlane.xlu0 %443
        %v445 = vrcp.pop %v444
        %v446 = vmul.f32 %v441, %v445
        %447 = vrot.lane.b32.xlu0 %v352, 64
        %v448 = vpop.permute.xlu0 %447
        %v451 = vsel %vm435, %v446, 0
        %453 = vmatprep.subr.mxu0 0.0
        %454 = vmatpush1.msra.mxu0 0.0
        %455 = vmatprep.subr.mxu0 0.0
        %456 = vmatpush1.msra.mxu0 0.0
        %457 = vmatprep.subr.mxu0 0.0
        %458 = vmatpush1.msra.mxu0 0.0
        %459 = vmatprep.subr.mxu0 0.0
        %460 = vmatpush1.msra.mxu0 0.0
        %461 = vmatprep.subr.mxu0 0.0
        %462 = vmatpush1.msra.mxu0 0.0
        %463 = vmatprep.subr.mxu0 0.0
        %464 = vmatpush1.msra.mxu0 0.0
        %465 = vmatprep.subr.mxu0 0.0
        %466 = vmatpush1.msra.mxu0 0.0
        %467 = vmatprep.subr.mxu0 0.0
        %468 = vmatpush1.msra.mxu0 0.0
        %469 = vmatprep.subr.mxu0 0.0
        %470 = vmatpush1.msra.mxu0 0.0
        %471 = vmatprep.subr.mxu0 0.0
        %472 = vmatpush1.msra.mxu0 0.0
        %473 = vmatprep.subr.mxu0 0.0
        %474 = vmatpush1.msra.mxu0 0.0
        %475 = vmatprep.subr.mxu0 0.0
        %476 = vmatpush1.msra.mxu0 0.0
        %477 = vmatprep.subr.mxu0 0.0
        %478 = vmatpush1.msra.mxu0 0.0
        %479 = vmatprep.subr.mxu0 0.0
        %480 = vmatpush1.msra.mxu0 0.0
        %481 = vmatprep.subr.mxu0 0.0
        %482 = vmatpush1.msra.mxu0 0.0
        %483 = vmatprep.subr.mxu0 0.0
        %484 = vmatpush1.msra.mxu0 %v448
        %485 = vmatprep.subr.mxu0 0.0
        %486 = vmatpush2.msra.mxu0 0.0
        %487 = vmatprep.subr.mxu0 0.0
        %488 = vmatpush2.msra.mxu0 0.0
        %489 = vmatprep.subr.mxu0 0.0
        %490 = vmatpush2.msra.mxu0 0.0
        %491 = vmatprep.subr.mxu0 0.0
        %492 = vmatpush2.msra.mxu0 0.0
        %493 = vmatprep.subr.mxu0 0.0
        %494 = vmatpush2.msra.mxu0 0.0
        %495 = vmatprep.subr.mxu0 0.0
        %496 = vmatpush2.msra.mxu0 0.0
        %497 = vmatprep.subr.mxu0 0.0
        %498 = vmatpush2.msra.mxu0 0.0
        %499 = vmatprep.subr.mxu0 0.0
        %500 = vmatpush2.msra.mxu0 0.0
        %501 = vmatprep.subr.mxu0 0.0
        %502 = vmatpush2.msra.mxu0 0.0
        %503 = vmatprep.subr.mxu0 0.0
        %504 = vmatpush2.msra.mxu0 0.0
        %505 = vmatprep.subr.mxu0 0.0
        %506 = vmatpush2.msra.mxu0 0.0
        %507 = vmatprep.subr.mxu0 0.0
        %508 = vmatpush2.msra.mxu0 0.0
        %509 = vmatprep.subr.mxu0 0.0
        %510 = vmatpush2.msra.mxu0 0.0
        %511 = vmatprep.subr.mxu0 0.0
        %512 = vmatpush2.msra.mxu0 0.0
        %513 = vmatprep.subr.mxu0 0.0
        %514 = vmatpush2.msra.mxu0 0.0
        %515 = vmatprep.subr.mxu0 0.0
        %516 = vmatpush2.msra.mxu0 0.0
        %517 = vmatprep.mubr.f32.mxu0 0.0
        %518 = vmatmul.mubr.f32.gmra.mxu0 %v451
        %v519 = vpop.f32.mrf.mxu0
        %v520 = vadd.f32 0.0, %v519
        %v521 = vpop.f32.mrf.mxu0
        %522 = vdwg.mxu0
        %523 = vst.msk [vmem:[#allocation2] sm:$0xff] %vm359, %v520
        %524 = vrot.lane.b32.xlu0 %v355, 124
        %v525 = vpop.permute.xlu0 %524
        %526 = vrot.lane.b32.xlu0 %v352, 92
        %v527 = vpop.permute.xlu0 %526
        %v528 = vsel %vm359, %v525, 0
        %v530 = vsel %vm359, %v527, 0
        %532 = vmatprep.subr.mxu0 0.0
        %533 = vmatpush1.xpose.msra.mxu0 0.0
        %534 = vmatprep.subr.mxu0 0.0
        %535 = vmatpush1.xpose.msra.mxu0 0.0
        %536 = vmatprep.subr.mxu0 0.0
        %537 = vmatpush1.xpose.msra.mxu0 0.0
        %538 = vmatprep.subr.mxu0 0.0
        %539 = vmatpush1.xpose.msra.mxu0 0.0
        %540 = vmatprep.subr.mxu0 0.0
        %541 = vmatpush1.xpose.msra.mxu0 0.0
        %542 = vmatprep.subr.mxu0 0.0
        %543 = vmatpush1.xpose.msra.mxu0 0.0
        %544 = vmatprep.subr.mxu0 0.0
        %545 = vmatpush1.xpose.msra.mxu0 0.0
        %546 = vmatprep.subr.mxu0 0.0
        %547 = vmatpush1.xpose.msra.mxu0 0.0
        %548 = vmatprep.subr.mxu0 0.0
        %549 = vmatpush1.xpose.msra.mxu0 0.0
        %550 = vmatprep.subr.mxu0 0.0
        %551 = vmatpush1.xpose.msra.mxu0 0.0
        %552 = vmatprep.subr.mxu0 0.0
        %553 = vmatpush1.xpose.msra.mxu0 0.0
        %554 = vmatprep.subr.mxu0 0.0
        %555 = vmatpush1.xpose.msra.mxu0 0.0
        %556 = vmatprep.subr.mxu0 0.0
        %557 = vmatpush1.xpose.msra.mxu0 0.0
        %558 = vmatprep.subr.mxu0 0.0
        %559 = vmatpush1.xpose.msra.mxu0 0.0
        %560 = vmatprep.subr.mxu0 0.0
        %561 = vmatpush1.xpose.msra.mxu0 0.0
        %562 = vmatprep.subr.mxu0 0.0
        %563 = vmatpush1.xpose.msra.mxu0 %v530
        %564 = vmatprep.subr.mxu0 0.0
        %565 = vmatpush2.xpose.msra.mxu0 0.0
        %566 = vmatprep.subr.mxu0 0.0
        %567 = vmatpush2.xpose.msra.mxu0 0.0
        %568 = vmatprep.subr.mxu0 0.0
        %569 = vmatpush2.xpose.msra.mxu0 0.0
        %570 = vmatprep.subr.mxu0 0.0
        %571 = vmatpush2.xpose.msra.mxu0 0.0
        %572 = vmatprep.subr.mxu0 0.0
        %573 = vmatpush2.xpose.msra.mxu0 0.0
        %574 = vmatprep.subr.mxu0 0.0
        %575 = vmatpush2.xpose.msra.mxu0 0.0
        %576 = vmatprep.subr.mxu0 0.0
        %577 = vmatpush2.xpose.msra.mxu0 0.0
        %578 = vmatprep.subr.mxu0 0.0
        %579 = vmatpush2.xpose.msra.mxu0 0.0
        %580 = vmatprep.subr.mxu0 0.0
        %581 = vmatpush2.xpose.msra.mxu0 0.0
        %582 = vmatprep.subr.mxu0 0.0
        %583 = vmatpush2.xpose.msra.mxu0 0.0
        %584 = vmatprep.subr.mxu0 0.0
        %585 = vmatpush2.xpose.msra.mxu0 0.0
        %586 = vmatprep.subr.mxu0 0.0
        %587 = vmatpush2.xpose.msra.mxu0 0.0
        %588 = vmatprep.subr.mxu0 0.0
        %589 = vmatpush2.xpose.msra.mxu0 0.0
        %590 = vmatprep.subr.mxu0 0.0
        %591 = vmatpush2.xpose.msra.mxu0 0.0
        %592 = vmatprep.subr.mxu0 0.0
        %593 = vmatpush2.xpose.msra.mxu0 0.0
        %594 = vmatprep.subr.mxu0 0.0
        %595 = vmatpush2.xpose.msra.mxu0 0.0
        %596 = vmatprep.mubr.f32.mxu0 0.0
        %597 = vmatmul.mubr.f32.gmra.mxu0 %v528
        %v598 = vpop.f32.mrf.mxu0
        %v599 = vadd.f32 0.0, %v598
        %v600 = vpop.f32.mrf.mxu0
        %601 = vdwg.mxu0
        %v602 = vsel %vm435, %v599, -inf
        %603 = vmax.xlane.f32.xlu0 %v602
        %v604 = vpop.xlane.xlu0 %603
        %v605 = vsub.f32 %v599, %v604
        %v606 = vmul.f32 %v605, 1.442695
        %v607 = vpow.pop %v606
        %v608 = vsel %vm435, %v607, 0.0
        %609 = vadd.xlane.f32.xlu0 %v608
        %v610 = vpop.xlane.xlu0 %609
        %v611 = vrcp.pop %v610
        %v612 = vmul.f32 %v607, %v611
        %613 = vrot.lane.b32.xlu0 %v352, 60
        %v614 = vpop.permute.xlu0 %613
        %v617 = vsel %vm435, %v612, 0
        %619 = vmatprep.subr.mxu0 0.0
        %620 = vmatpush1.msra.mxu0 0.0
        %621 = vmatprep.subr.mxu0 0.0
        %622 = vmatpush1.msra.mxu0 0.0
        %623 = vmatprep.subr.mxu0 0.0
        %624 = vmatpush1.msra.mxu0 0.0
        %625 = vmatprep.subr.mxu0 0.0
        %626 = vmatpush1.msra.mxu0 0.0
        %627 = vmatprep.subr.mxu0 0.0
        %628 = vmatpush1.msra.mxu0 0.0
        %629 = vmatprep.subr.mxu0 0.0
        %630 = vmatpush1.msra.mxu0 0.0
        %631 = vmatprep.subr.mxu0 0.0
        %632 = vmatpush1.msra.mxu0 0.0
        %633 = vmatprep.subr.mxu0 0.0
        %634 = vmatpush1.msra.mxu0 0.0
        %635 = vmatprep.subr.mxu0 0.0
        %636 = vmatpush1.msra.mxu0 0.0
        %637 = vmatprep.subr.mxu0 0.0
        %638 = vmatpush1.msra.mxu0 0.0
        %639 = vmatprep.subr.mxu0 0.0
        %640 = vmatpush1.msra.mxu0 0.0
        %641 = vmatprep.subr.mxu0 0.0
        %642 = vmatpush1.msra.mxu0 0.0
        %643 = vmatprep.subr.mxu0 0.0
        %644 = vmatpush1.msra.mxu0 0.0
        %645 = vmatprep.subr.mxu0 0.0
        %646 = vmatpush1.msra.mxu0 0.0
        %647 = vmatprep.subr.mxu0 0.0
        %648 = vmatpush1.msra.mxu0 0.0
        %649 = vmatprep.subr.mxu0 0.0
        %650 = vmatpush1.msra.mxu0 %v614
        %651 = vmatprep.subr.mxu0 0.0
        %652 = vmatpush2.msra.mxu0 0.0
        %653 = vmatprep.subr.mxu0 0.0
        %654 = vmatpush2.msra.mxu0 0.0
        %655 = vmatprep.subr.mxu0 0.0
        %656 = vmatpush2.msra.mxu0 0.0
        %657 = vmatprep.subr.mxu0 0.0
        %658 = vmatpush2.msra.mxu0 0.0
        %659 = vmatprep.subr.mxu0 0.0
        %660 = vmatpush2.msra.mxu0 0.0
        %661 = vmatprep.subr.mxu0 0.0
        %662 = vmatpush2.msra.mxu0 0.0
        %663 = vmatprep.subr.mxu0 0.0
        %664 = vmatpush2.msra.mxu0 0.0
        %665 = vmatprep.subr.mxu0 0.0
        %666 = vmatpush2.msra.mxu0 0.0
        %667 = vmatprep.subr.mxu0 0.0
        %668 = vmatpush2.msra.mxu0 0.0
        %669 = vmatprep.subr.mxu0 0.0
        %670 = vmatpush2.msra.mxu0 0.0
        %671 = vmatprep.subr.mxu0 0.0
        %672 = vmatpush2.msra.mxu0 0.0
        %673 = vmatprep.subr.mxu0 0.0
        %674 = vmatpush2.msra.mxu0 0.0
        %675 = vmatprep.subr.mxu0 0.0
        %676 = vmatpush2.msra.mxu0 0.0
        %677 = vmatprep.subr.mxu0 0.0
        %678 = vmatpush2.msra.mxu0 0.0
        %679 = vmatprep.subr.mxu0 0.0
        %680 = vmatpush2.msra.mxu0 0.0
        %681 = vmatprep.subr.mxu0 0.0
        %682 = vmatpush2.msra.mxu0 0.0
        %683 = vmatprep.mubr.f32.mxu0 0.0
        %684 = vmatmul.mubr.f32.gmra.mxu0 %v617
        %v685 = vpop.f32.mrf.mxu0
        %v686 = vadd.f32 0.0, %v685
        %v687 = vpop.f32.mrf.mxu0
        %688 = vdwg.mxu0
        %690 = vrot.lane.b32.xlu0 %v686, 4
        %v691 = vpop.permute.xlu0 %690
        %vm693 = vcmask 64544
        %694 = vst.msk [vmem:[#allocation2] sm:$0xff] %vm693, %v691
        %695 = vrot.lane.b32.xlu0 %v355, 120
        %v696 = vpop.permute.xlu0 %695
        %697 = vrot.lane.b32.xlu0 %v352, 88
        %v698 = vpop.permute.xlu0 %697
        %v699 = vsel %vm359, %v696, 0
        %v701 = vsel %vm359, %v698, 0
        %703 = vmatprep.subr.mxu0 0.0
        %704 = vmatpush1.xpose.msra.mxu0 0.0
        %705 = vmatprep.subr.mxu0 0.0
        %706 = vmatpush1.xpose.msra.mxu0 0.0
        %707 = vmatprep.subr.mxu0 0.0
        %708 = vmatpush1.xpose.msra.mxu0 0.0
        %709 = vmatprep.subr.mxu0 0.0
        %710 = vmatpush1.xpose.msra.mxu0 0.0
        %711 = vmatprep.subr.mxu0 0.0
        %712 = vmatpush1.xpose.msra.mxu0 0.0
        %713 = vmatprep.subr.mxu0 0.0
        %714 = vmatpush1.xpose.msra.mxu0 0.0
        %715 = vmatprep.subr.mxu0 0.0
        %716 = vmatpush1.xpose.msra.mxu0 0.0
        %717 = vmatprep.subr.mxu0 0.0
        %718 = vmatpush1.xpose.msra.mxu0 0.0
        %719 = vmatprep.subr.mxu0 0.0
        %720 = vmatpush1.xpose.msra.mxu0 0.0
        %721 = vmatprep.subr.mxu0 0.0
        %722 = vmatpush1.xpose.msra.mxu0 0.0
        %723 = vmatprep.subr.mxu0 0.0
        %724 = vmatpush1.xpose.msra.mxu0 0.0
        %725 = vmatprep.subr.mxu0 0.0
        %726 = vmatpush1.xpose.msra.mxu0 0.0
        %727 = vmatprep.subr.mxu0 0.0
        %728 = vmatpush1.xpose.msra.mxu0 0.0
        %729 = vmatprep.subr.mxu0 0.0
        %730 = vmatpush1.xpose.msra.mxu0 0.0
        %731 = vmatprep.subr.mxu0 0.0
        %732 = vmatpush1.xpose.msra.mxu0 0.0
        %733 = vmatprep.subr.mxu0 0.0
        %734 = vmatpush1.xpose.msra.mxu0 %v701
        %735 = vmatprep.subr.mxu0 0.0
        %736 = vmatpush2.xpose.msra.mxu0 0.0
        %737 = vmatprep.subr.mxu0 0.0
        %738 = vmatpush2.xpose.msra.mxu0 0.0
        %739 = vmatprep.subr.mxu0 0.0
        %740 = vmatpush2.xpose.msra.mxu0 0.0
        %741 = vmatprep.subr.mxu0 0.0
        %742 = vmatpush2.xpose.msra.mxu0 0.0
        %743 = vmatprep.subr.mxu0 0.0
        %744 = vmatpush2.xpose.msra.mxu0 0.0
        %745 = vmatprep.subr.mxu0 0.0
        %746 = vmatpush2.xpose.msra.mxu0 0.0
        %747 = vmatprep.subr.mxu0 0.0
        %748 = vmatpush2.xpose.msra.mxu0 0.0
        %749 = vmatprep.subr.mxu0 0.0
        %750 = vmatpush2.xpose.msra.mxu0 0.0
        %751 = vmatprep.subr.mxu0 0.0
        %752 = vmatpush2.xpose.msra.mxu0 0.0
        %753 = vmatprep.subr.mxu0 0.0
        %754 = vmatpush2.xpose.msra.mxu0 0.0
        %755 = vmatprep.subr.mxu0 0.0
        %756 = vmatpush2.xpose.msra.mxu0 0.0
        %757 = vmatprep.subr.mxu0 0.0
        %758 = vmatpush2.xpose.msra.mxu0 0.0
        %759 = vmatprep.subr.mxu0 0.0
        %760 = vmatpush2.xpose.msra.mxu0 0.0
        %761 = vmatprep.subr.mxu0 0.0
        %762 = vmatpush2.xpose.msra.mxu0 0.0
        %763 = vmatprep.subr.mxu0 0.0
        %764 = vmatpush2.xpose.msra.mxu0 0.0
        %765 = vmatprep.subr.mxu0 0.0
        %766 = vmatpush2.xpose.msra.mxu0 0.0
        %767 = vmatprep.mubr.f32.mxu0 0.0
        %768 = vmatmul.mubr.f32.gmra.mxu0 %v699
        %v769 = vpop.f32.mrf.mxu0
        %v770 = vadd.f32 0.0, %v769
        %v771 = vpop.f32.mrf.mxu0
        %772 = vdwg.mxu0
        %v773 = vsel %vm435, %v770, -inf
        %774 = vmax.xlane.f32.xlu0 %v773
        %v775 = vpop.xlane.xlu0 %774
        %v776 = vsub.f32 %v770, %v775
        %v777 = vmul.f32 %v776, 1.442695
        %v778 = vpow.pop %v777
        %v779 = vsel %vm435, %v778, 0.0
        %780 = vadd.xlane.f32.xlu0 %v779
        %v781 = vpop.xlane.xlu0 %780
        %v782 = vrcp.pop %v781
        %v783 = vmul.f32 %v778, %v782
        %784 = vrot.lane.b32.xlu0 %v352, 56
        %v785 = vpop.permute.xlu0 %784
        %v788 = vsel %vm435, %v783, 0
        %790 = vmatprep.subr.mxu0 0.0
        %791 = vmatpush1.msra.mxu0 0.0
        %792 = vmatprep.subr.mxu0 0.0
        %793 = vmatpush1.msra.mxu0 0.0
        %794 = vmatprep.subr.mxu0 0.0
        %795 = vmatpush1.msra.mxu0 0.0
        %796 = vmatprep.subr.mxu0 0.0
        %797 = vmatpush1.msra.mxu0 0.0
        %798 = vmatprep.subr.mxu0 0.0
        %799 = vmatpush1.msra.mxu0 0.0
        %800 = vmatprep.subr.mxu0 0.0
        %801 = vmatpush1.msra.mxu0 0.0
        %802 = vmatprep.subr.mxu0 0.0
        %803 = vmatpush1.msra.mxu0 0.0
        %804 = vmatprep.subr.mxu0 0.0
        %805 = vmatpush1.msra.mxu0 0.0
        %806 = vmatprep.subr.mxu0 0.0
        %807 = vmatpush1.msra.mxu0 0.0
        %808 = vmatprep.subr.mxu0 0.0
        %809 = vmatpush1.msra.mxu0 0.0
        %810 = vmatprep.subr.mxu0 0.0
        %811 = vmatpush1.msra.mxu0 0.0
        %812 = vmatprep.subr.mxu0 0.0
        %813 = vmatpush1.msra.mxu0 0.0
        %814 = vmatprep.subr.mxu0 0.0
        %815 = vmatpush1.msra.mxu0 0.0
        %816 = vmatprep.subr.mxu0 0.0
        %817 = vmatpush1.msra.mxu0 0.0
        %818 = vmatprep.subr.mxu0 0.0
        %819 = vmatpush1.msra.mxu0 0.0
        %820 = vmatprep.subr.mxu0 0.0
        %821 = vmatpush1.msra.mxu0 %v785
        %822 = vmatprep.subr.mxu0 0.0
        %823 = vmatpush2.msra.mxu0 0.0
        %824 = vmatprep.subr.mxu0 0.0
        %825 = vmatpush2.msra.mxu0 0.0
        %826 = vmatprep.subr.mxu0 0.0
        %827 = vmatpush2.msra.mxu0 0.0
        %828 = vmatprep.subr.mxu0 0.0
        %829 = vmatpush2.msra.mxu0 0.0
        %830 = vmatprep.subr.mxu0 0.0
        %831 = vmatpush2.msra.mxu0 0.0
        %832 = vmatprep.subr.mxu0 0.0
        %833 = vmatpush2.msra.mxu0 0.0
        %834 = vmatprep.subr.mxu0 0.0
        %835 = vmatpush2.msra.mxu0 0.0
        %836 = vmatprep.subr.mxu0 0.0
        %837 = vmatpush2.msra.mxu0 0.0
        %838 = vmatprep.subr.mxu0 0.0
        %839 = vmatpush2.msra.mxu0 0.0
        %840 = vmatprep.subr.mxu0 0.0
        %841 = vmatpush2.msra.mxu0 0.0
        %842 = vmatprep.subr.mxu0 0.0
        %843 = vmatpush2.msra.mxu0 0.0
        %844 = vmatprep.subr.mxu0 0.0
        %845 = vmatpush2.msra.mxu0 0.0
        %846 = vmatprep.subr.mxu0 0.0
        %847 = vmatpush2.msra.mxu0 0.0
        %848 = vmatprep.subr.mxu0 0.0
        %849 = vmatpush2.msra.mxu0 0.0
        %850 = vmatprep.subr.mxu0 0.0
        %851 = vmatpush2.msra.mxu0 0.0
        %852 = vmatprep.subr.mxu0 0.0
        %853 = vmatpush2.msra.mxu0 0.0
        %854 = vmatprep.mubr.f32.mxu0 0.0
        %855 = vmatmul.mubr.f32.gmra.mxu0 %v788
        %v856 = vpop.f32.mrf.mxu0
        %v857 = vadd.f32 0.0, %v856
        %v858 = vpop.f32.mrf.mxu0
        %859 = vdwg.mxu0
        %861 = vrot.lane.b32.xlu0 %v857, 8
        %v862 = vpop.permute.xlu0 %861
        %vm864 = vcmask 97344
        %865 = vst.msk [vmem:[#allocation2] sm:$0xff] %vm864, %v862
        %866 = vrot.lane.b32.xlu0 %v355, 116
        %v867 = vpop.permute.xlu0 %866
        %868 = vrot.lane.b32.xlu0 %v352, 84
        %v869 = vpop.permute.xlu0 %868
        %v870 = vsel %vm359, %v867, 0
        %v872 = vsel %vm359, %v869, 0
        %874 = vmatprep.subr.mxu0 0.0
        %875 = vmatpush1.xpose.msra.mxu0 0.0
        %876 = vmatprep.subr.mxu0 0.0
        %877 = vmatpush1.xpose.msra.mxu0 0.0
        %878 = vmatprep.subr.mxu0 0.0
        %879 = vmatpush1.xpose.msra.mxu0 0.0
        %880 = vmatprep.subr.mxu0 0.0
        %881 = vmatpush1.xpose.msra.mxu0 0.0
        %882 = vmatprep.subr.mxu0 0.0
        %883 = vmatpush1.xpose.msra.mxu0 0.0
        %884 = vmatprep.subr.mxu0 0.0
        %885 = vmatpush1.xpose.msra.mxu0 0.0
        %886 = vmatprep.subr.mxu0 0.0
        %887 = vmatpush1.xpose.msra.mxu0 0.0
        %888 = vmatprep.subr.mxu0 0.0
        %889 = vmatpush1.xpose.msra.mxu0 0.0
        %890 = vmatprep.subr.mxu0 0.0
        %891 = vmatpush1.xpose.msra.mxu0 0.0
        %892 = vmatprep.subr.mxu0 0.0
        %893 = vmatpush1.xpose.msra.mxu0 0.0
        %894 = vmatprep.subr.mxu0 0.0
        %895 = vmatpush1.xpose.msra.mxu0 0.0
        %896 = vmatprep.subr.mxu0 0.0
        %897 = vmatpush1.xpose.msra.mxu0 0.0
        %898 = vmatprep.subr.mxu0 0.0
        %899 = vmatpush1.xpose.msra.mxu0 0.0
        %900 = vmatprep.subr.mxu0 0.0
        %901 = vmatpush1.xpose.msra.mxu0 0.0
        %902 = vmatprep.subr.mxu0 0.0
        %903 = vmatpush1.xpose.msra.mxu0 0.0
        %904 = vmatprep.subr.mxu0 0.0
        %905 = vmatpush1.xpose.msra.mxu0 %v872
        %906 = vmatprep.subr.mxu0 0.0
        %907 = vmatpush2.xpose.msra.mxu0 0.0
        %908 = vmatprep.subr.mxu0 0.0
        %909 = vmatpush2.xpose.msra.mxu0 0.0
        %910 = vmatprep.subr.mxu0 0.0
        %911 = vmatpush2.xpose.msra.mxu0 0.0
        %912 = vmatprep.subr.mxu0 0.0
        %913 = vmatpush2.xpose.msra.mxu0 0.0
        %914 = vmatprep.subr.mxu0 0.0
        %915 = vmatpush2.xpose.msra.mxu0 0.0
        %916 = vmatprep.subr.mxu0 0.0
        %917 = vmatpush2.xpose.msra.mxu0 0.0
        %918 = vmatprep.subr.mxu0 0.0
        %919 = vmatpush2.xpose.msra.mxu0 0.0
        %920 = vmatprep.subr.mxu0 0.0
        %921 = vmatpush2.xpose.msra.mxu0 0.0
        %922 = vmatprep.subr.mxu0 0.0
        %923 = vmatpush2.xpose.msra.mxu0 0.0
        %924 = vmatprep.subr.mxu0 0.0
        %925 = vmatpush2.xpose.msra.mxu0 0.0
        %926 = vmatprep.subr.mxu0 0.0
        %927 = vmatpush2.xpose.msra.mxu0 0.0
        %928 = vmatprep.subr.mxu0 0.0
        %929 = vmatpush2.xpose.msra.mxu0 0.0
        %930 = vmatprep.subr.mxu0 0.0
        %931 = vmatpush2.xpose.msra.mxu0 0.0
        %932 = vmatprep.subr.mxu0 0.0
        %933 = vmatpush2.xpose.msra.mxu0 0.0
        %934 = vmatprep.subr.mxu0 0.0
        %935 = vmatpush2.xpose.msra.mxu0 0.0
        %936 = vmatprep.subr.mxu0 0.0
        %937 = vmatpush2.xpose.msra.mxu0 0.0
        %938 = vmatprep.mubr.f32.mxu0 0.0
        %939 = vmatmul.mubr.f32.gmra.mxu0 %v870
        %v940 = vpop.f32.mrf.mxu0
        %v941 = vadd.f32 0.0, %v940
        %v942 = vpop.f32.mrf.mxu0
        %943 = vdwg.mxu0
        %v944 = vsel %vm435, %v941, -inf
        %945 = vmax.xlane.f32.xlu0 %v944
        %v946 = vpop.xlane.xlu0 %945
        %v947 = vsub.f32 %v941, %v946
        %v948 = vmul.f32 %v947, 1.442695
        %v949 = vpow.pop %v948
        %v950 = vsel %vm435, %v949, 0.0
        %951 = vadd.xlane.f32.xlu0 %v950
        %v952 = vpop.xlane.xlu0 %951
        %v953 = vrcp.pop %v952
        %v954 = vmul.f32 %v949, %v953
        %955 = vrot.lane.b32.xlu0 %v352, 52
        %v956 = vpop.permute.xlu0 %955
        %v959 = vsel %vm435, %v954, 0
        %961 = vmatprep.subr.mxu0 0.0
        %962 = vmatpush1.msra.mxu0 0.0
        %963 = vmatprep.subr.mxu0 0.0
        %964 = vmatpush1.msra.mxu0 0.0
        %965 = vmatprep.subr.mxu0 0.0
        %966 = vmatpush1.msra.mxu0 0.0
        %967 = vmatprep.subr.mxu0 0.0
        %968 = vmatpush1.msra.mxu0 0.0
        %969 = vmatprep.subr.mxu0 0.0
        %970 = vmatpush1.msra.mxu0 0.0
        %971 = vmatprep.subr.mxu0 0.0
        %972 = vmatpush1.msra.mxu0 0.0
        %973 = vmatprep.subr.mxu0 0.0
        %974 = vmatpush1.msra.mxu0 0.0
        %975 = vmatprep.subr.mxu0 0.0
        %976 = vmatpush1.msra.mxu0 0.0
        %977 = vmatprep.subr.mxu0 0.0
        %978 = vmatpush1.msra.mxu0 0.0
        %979 = vmatprep.subr.mxu0 0.0
        %980 = vmatpush1.msra.mxu0 0.0
        %981 = vmatprep.subr.mxu0 0.0
        %982 = vmatpush1.msra.mxu0 0.0
        %983 = vmatprep.subr.mxu0 0.0
        %984 = vmatpush1.msra.mxu0 0.0
        %985 = vmatprep.subr.mxu0 0.0
        %986 = vmatpush1.msra.mxu0 0.0
        %987 = vmatprep.subr.mxu0 0.0
        %988 = vmatpush1.msra.mxu0 0.0
        %989 = vmatprep.subr.mxu0 0.0
        %990 = vmatpush1.msra.mxu0 0.0
        %991 = vmatprep.subr.mxu0 0.0
        %992 = vmatpush1.msra.mxu0 %v956
        %993 = vmatprep.subr.mxu0 0.0
        %994 = vmatpush2.msra.mxu0 0.0
        %995 = vmatprep.subr.mxu0 0.0
        %996 = vmatpush2.msra.mxu0 0.0
        %997 = vmatprep.subr.mxu0 0.0
        %998 = vmatpush2.msra.mxu0 0.0
        %999 = vmatprep.subr.mxu0 0.0
        %1000 = vmatpush2.msra.mxu0 0.0
        %1001 = vmatprep.subr.mxu0 0.0
        %1002 = vmatpush2.msra.mxu0 0.0
        %1003 = vmatprep.subr.mxu0 0.0
        %1004 = vmatpush2.msra.mxu0 0.0
        %1005 = vmatprep.subr.mxu0 0.0
        %1006 = vmatpush2.msra.mxu0 0.0
        %1007 = vmatprep.subr.mxu0 0.0
        %1008 = vmatpush2.msra.mxu0 0.0
        %1009 = vmatprep.subr.mxu0 0.0
        %1010 = vmatpush2.msra.mxu0 0.0
        %1011 = vmatprep.subr.mxu0 0.0
        %1012 = vmatpush2.msra.mxu0 0.0
        %1013 = vmatprep.subr.mxu0 0.0
        %1014 = vmatpush2.msra.mxu0 0.0
        %1015 = vmatprep.subr.mxu0 0.0
        %1016 = vmatpush2.msra.mxu0 0.0
        %1017 = vmatprep.subr.mxu0 0.0
        %1018 = vmatpush2.msra.mxu0 0.0
        %1019 = vmatprep.subr.mxu0 0.0
        %1020 = vmatpush2.msra.mxu0 0.0
        %1021 = vmatprep.subr.mxu0 0.0
        %1022 = vmatpush2.msra.mxu0 0.0
        %1023 = vmatprep.subr.mxu0 0.0
        %1024 = vmatpush2.msra.mxu0 0.0
        %1025 = vmatprep.mubr.f32.mxu0 0.0
        %1026 = vmatmul.mubr.f32.gmra.mxu0 %v959
        %v1027 = vpop.f32.mrf.mxu0
        %v1028 = vadd.f32 0.0, %v1027
        %v1029 = vpop.f32.mrf.mxu0
        %1030 = vdwg.mxu0
        %1032 = vrot.lane.b32.xlu0 %v1028, 12
        %v1033 = vpop.permute.xlu0 %1032
        %vm1035 = vcmask 130144
        %1036 = vst.msk [vmem:[#allocation2] sm:$0xff] %vm1035, %v1033
        %1037 = vrot.lane.b32.xlu0 %v355, 112
        %v1038 = vpop.permute.xlu0 %1037
        %1039 = vrot.lane.b32.xlu0 %v352, 80
        %v1040 = vpop.permute.xlu0 %1039
        %v1041 = vsel %vm359, %v1038, 0
        %v1043 = vsel %vm359, %v1040, 0
        %1045 = vmatprep.subr.mxu0 0.0
        %1046 = vmatpush1.xpose.msra.mxu0 0.0
        %1047 = vmatprep.subr.mxu0 0.0
        %1048 = vmatpush1.xpose.msra.mxu0 0.0
        %1049 = vmatprep.subr.mxu0 0.0
        %1050 = vmatpush1.xpose.msra.mxu0 0.0
        %1051 = vmatprep.subr.mxu0 0.0
        %1052 = vmatpush1.xpose.msra.mxu0 0.0
        %1053 = vmatprep.subr.mxu0 0.0
        %1054 = vmatpush1.xpose.msra.mxu0 0.0
        %1055 = vmatprep.subr.mxu0 0.0
        %1056 = vmatpush1.xpose.msra.mxu0 0.0
        %1057 = vmatprep.subr.mxu0 0.0
        %1058 = vmatpush1.xpose.msra.mxu0 0.0
        %1059 = vmatprep.subr.mxu0 0.0
        %1060 = vmatpush1.xpose.msra.mxu0 0.0
        %1061 = vmatprep.subr.mxu0 0.0
        %1062 = vmatpush1.xpose.msra.mxu0 0.0
        %1063 = vmatprep.subr.mxu0 0.0
        %1064 = vmatpush1.xpose.msra.mxu0 0.0
        %1065 = vmatprep.subr.mxu0 0.0
        %1066 = vmatpush1.xpose.msra.mxu0 0.0
        %1067 = vmatprep.subr.mxu0 0.0
        %1068 = vmatpush1.xpose.msra.mxu0 0.0
        %1069 = vmatprep.subr.mxu0 0.0
        %1070 = vmatpush1.xpose.msra.mxu0 0.0
        %1071 = vmatprep.subr.mxu0 0.0
        %1072 = vmatpush1.xpose.msra.mxu0 0.0
        %1073 = vmatprep.subr.mxu0 0.0
        %1074 = vmatpush1.xpose.msra.mxu0 0.0
        %1075 = vmatprep.subr.mxu0 0.0
        %1076 = vmatpush1.xpose.msra.mxu0 %v1043
        %1077 = vmatprep.subr.mxu0 0.0
        %1078 = vmatpush2.xpose.msra.mxu0 0.0
        %1079 = vmatprep.subr.mxu0 0.0
        %1080 = vmatpush2.xpose.msra.mxu0 0.0
        %1081 = vmatprep.subr.mxu0 0.0
        %1082 = vmatpush2.xpose.msra.mxu0 0.0
        %1083 = vmatprep.subr.mxu0 0.0
        %1084 = vmatpush2.xpose.msra.mxu0 0.0
        %1085 = vmatprep.subr.mxu0 0.0
        %1086 = vmatpush2.xpose.msra.mxu0 0.0
        %1087 = vmatprep.subr.mxu0 0.0
        %1088 = vmatpush2.xpose.msra.mxu0 0.0
        %1089 = vmatprep.subr.mxu0 0.0
        %1090 = vmatpush2.xpose.msra.mxu0 0.0
        %1091 = vmatprep.subr.mxu0 0.0
        %1092 = vmatpush2.xpose.msra.mxu0 0.0
        %1093 = vmatprep.subr.mxu0 0.0
        %1094 = vmatpush2.xpose.msra.mxu0 0.0
        %1095 = vmatprep.subr.mxu0 0.0
        %1096 = vmatpush2.xpose.msra.mxu0 0.0
        %1097 = vmatprep.subr.mxu0 0.0
        %1098 = vmatpush2.xpose.msra.mxu0 0.0
        %1099 = vmatprep.subr.mxu0 0.0
        %1100 = vmatpush2.xpose.msra.mxu0 0.0
        %1101 = vmatprep.subr.mxu0 0.0
        %1102 = vmatpush2.xpose.msra.mxu0 0.0
        %1103 = vmatprep.subr.mxu0 0.0
        %1104 = vmatpush2.xpose.msra.mxu0 0.0
        %1105 = vmatprep.subr.mxu0 0.0
        %1106 = vmatpush2.xpose.msra.mxu0 0.0
        %1107 = vmatprep.subr.mxu0 0.0
        %1108 = vmatpush2.xpose.msra.mxu0 0.0
        %1109 = vmatprep.mubr.f32.mxu0 0.0
        %1110 = vmatmul.mubr.f32.gmra.mxu0 %v1041
        %v1111 = vpop.f32.mrf.mxu0
        %v1112 = vadd.f32 0.0, %v1111
        %v1113 = vpop.f32.mrf.mxu0
        %1114 = vdwg.mxu0
        %v1115 = vsel %vm435, %v1112, -inf
        %1116 = vmax.xlane.f32.xlu0 %v1115
        %v1117 = vpop.xlane.xlu0 %1116
        %v1118 = vsub.f32 %v1112, %v1117
        %v1119 = vmul.f32 %v1118, 1.442695
        %v1120 = vpow.pop %v1119
        %v1121 = vsel %vm435, %v1120, 0.0
        %1122 = vadd.xlane.f32.xlu0 %v1121
        %v1123 = vpop.xlane.xlu0 %1122
        %v1124 = vrcp.pop %v1123
        %v1125 = vmul.f32 %v1120, %v1124
        %1126 = vrot.lane.b32.xlu0 %v352, 48
        %v1127 = vpop.permute.xlu0 %1126
        %v1130 = vsel %vm435, %v1125, 0
        %1132 = vmatprep.subr.mxu0 0.0
        %1133 = vmatpush1.msra.mxu0 0.0
        %1134 = vmatprep.subr.mxu0 0.0
        %1135 = vmatpush1.msra.mxu0 0.0
        %1136 = vmatprep.subr.mxu0 0.0
        %1137 = vmatpush1.msra.mxu0 0.0
        %1138 = vmatprep.subr.mxu0 0.0
        %1139 = vmatpush1.msra.mxu0 0.0
        %1140 = vmatprep.subr.mxu0 0.0
        %1141 = vmatpush1.msra.mxu0 0.0
        %1142 = vmatprep.subr.mxu0 0.0
        %1143 = vmatpush1.msra.mxu0 0.0
        %1144 = vmatprep.subr.mxu0 0.0
        %1145 = vmatpush1.msra.mxu0 0.0
        %1146 = vmatprep.subr.mxu0 0.0
        %1147 = vmatpush1.msra.mxu0 0.0
        %1148 = vmatprep.subr.mxu0 0.0
        %1149 = vmatpush1.msra.mxu0 0.0
        %1150 = vmatprep.subr.mxu0 0.0
        %1151 = vmatpush1.msra.mxu0 0.0
        %1152 = vmatprep.subr.mxu0 0.0
        %1153 = vmatpush1.msra.mxu0 0.0
        %1154 = vmatprep.subr.mxu0 0.0
        %1155 = vmatpush1.msra.mxu0 0.0
        %1156 = vmatprep.subr.mxu0 0.0
        %1157 = vmatpush1.msra.mxu0 0.0
        %1158 = vmatprep.subr.mxu0 0.0
        %1159 = vmatpush1.msra.mxu0 0.0
        %1160 = vmatprep.subr.mxu0 0.0
        %1161 = vmatpush1.msra.mxu0 0.0
        %1162 = vmatprep.subr.mxu0 0.0
        %1163 = vmatpush1.msra.mxu0 %v1127
        %1164 = vmatprep.subr.mxu0 0.0
        %1165 = vmatpush2.msra.mxu0 0.0
        %1166 = vmatprep.subr.mxu0 0.0
        %1167 = vmatpush2.msra.mxu0 0.0
        %1168 = vmatprep.subr.mxu0 0.0
        %1169 = vmatpush2.msra.mxu0 0.0
        %1170 = vmatprep.subr.mxu0 0.0
        %1171 = vmatpush2.msra.mxu0 0.0
        %1172 = vmatprep.subr.mxu0 0.0
        %1173 = vmatpush2.msra.mxu0 0.0
        %1174 = vmatprep.subr.mxu0 0.0
        %1175 = vmatpush2.msra.mxu0 0.0
        %1176 = vmatprep.subr.mxu0 0.0
        %1177 = vmatpush2.msra.mxu0 0.0
        %1178 = vmatprep.subr.mxu0 0.0
        %1179 = vmatpush2.msra.mxu0 0.0
        %1180 = vmatprep.subr.mxu0 0.0
        %1181 = vmatpush2.msra.mxu0 0.0
        %1182 = vmatprep.subr.mxu0 0.0
        %1183 = vmatpush2.msra.mxu0 0.0
        %1184 = vmatprep.subr.mxu0 0.0
        %1185 = vmatpush2.msra.mxu0 0.0
        %1186 = vmatprep.subr.mxu0 0.0
        %1187 = vmatpush2.msra.mxu0 0.0
        %1188 = vmatprep.subr.mxu0 0.0
        %1189 = vmatpush2.msra.mxu0 0.0
        %1190 = vmatprep.subr.mxu0 0.0
        %1191 = vmatpush2.msra.mxu0 0.0
        %1192 = vmatprep.subr.mxu0 0.0
        %1193 = vmatpush2.msra.mxu0 0.0
        %1194 = vmatprep.subr.mxu0 0.0
        %1195 = vmatpush2.msra.mxu0 0.0
        %1196 = vmatprep.mubr.f32.mxu0 0.0
        %1197 = vmatmul.mubr.f32.gmra.mxu0 %v1130
        %v1198 = vpop.f32.mrf.mxu0
        %v1199 = vadd.f32 0.0, %v1198
        %v1200 = vpop.f32.mrf.mxu0
        %1201 = vdwg.mxu0
        %1203 = vrot.lane.b32.xlu0 %v1199, 16
        %v1204 = vpop.permute.xlu0 %1203
        %vm1206 = vcmask 162944
        %1207 = vst.msk [vmem:[#allocation2] sm:$0xff] %vm1206, %v1204
        %1208 = vrot.lane.b32.xlu0 %v355, 108
        %v1209 = vpop.permute.xlu0 %1208
        %1210 = vrot.lane.b32.xlu0 %v352, 76
        %v1211 = vpop.permute.xlu0 %1210
        %v1212 = vsel %vm359, %v1209, 0
        %v1214 = vsel %vm359, %v1211, 0
        %1216 = vmatprep.subr.mxu0 0.0
        %1217 = vmatpush1.xpose.msra.mxu0 0.0
        %1218 = vmatprep.subr.mxu0 0.0
        %1219 = vmatpush1.xpose.msra.mxu0 0.0
        %1220 = vmatprep.subr.mxu0 0.0
        %1221 = vmatpush1.xpose.msra.mxu0 0.0
        %1222 = vmatprep.subr.mxu0 0.0
        %1223 = vmatpush1.xpose.msra.mxu0 0.0
        %1224 = vmatprep.subr.mxu0 0.0
        %1225 = vmatpush1.xpose.msra.mxu0 0.0
        %1226 = vmatprep.subr.mxu0 0.0
        %1227 = vmatpush1.xpose.msra.mxu0 0.0
        %1228 = vmatprep.subr.mxu0 0.0
        %1229 = vmatpush1.xpose.msra.mxu0 0.0
        %1230 = vmatprep.subr.mxu0 0.0
        %1231 = vmatpush1.xpose.msra.mxu0 0.0
        %1232 = vmatprep.subr.mxu0 0.0
        %1233 = vmatpush1.xpose.msra.mxu0 0.0
        %1234 = vmatprep.subr.mxu0 0.0
        %1235 = vmatpush1.xpose.msra.mxu0 0.0
        %1236 = vmatprep.subr.mxu0 0.0
        %1237 = vmatpush1.xpose.msra.mxu0 0.0
        %1238 = vmatprep.subr.mxu0 0.0
        %1239 = vmatpush1.xpose.msra.mxu0 0.0
        %1240 = vmatprep.subr.mxu0 0.0
        %1241 = vmatpush1.xpose.msra.mxu0 0.0
        %1242 = vmatprep.subr.mxu0 0.0
        %1243 = vmatpush1.xpose.msra.mxu0 0.0
        %1244 = vmatprep.subr.mxu0 0.0
        %1245 = vmatpush1.xpose.msra.mxu0 0.0
        %1246 = vmatprep.subr.mxu0 0.0
        %1247 = vmatpush1.xpose.msra.mxu0 %v1214
        %1248 = vmatprep.subr.mxu0 0.0
        %1249 = vmatpush2.xpose.msra.mxu0 0.0
        %1250 = vmatprep.subr.mxu0 0.0
        %1251 = vmatpush2.xpose.msra.mxu0 0.0
        %1252 = vmatprep.subr.mxu0 0.0
        %1253 = vmatpush2.xpose.msra.mxu0 0.0
        %1254 = vmatprep.subr.mxu0 0.0
        %1255 = vmatpush2.xpose.msra.mxu0 0.0
        %1256 = vmatprep.subr.mxu0 0.0
        %1257 = vmatpush2.xpose.msra.mxu0 0.0
        %1258 = vmatprep.subr.mxu0 0.0
        %1259 = vmatpush2.xpose.msra.mxu0 0.0
        %1260 = vmatprep.subr.mxu0 0.0
        %1261 = vmatpush2.xpose.msra.mxu0 0.0
        %1262 = vmatprep.subr.mxu0 0.0
        %1263 = vmatpush2.xpose.msra.mxu0 0.0
        %1264 = vmatprep.subr.mxu0 0.0
        %1265 = vmatpush2.xpose.msra.mxu0 0.0
        %1266 = vmatprep.subr.mxu0 0.0
        %1267 = vmatpush2.xpose.msra.mxu0 0.0
        %1268 = vmatprep.subr.mxu0 0.0
        %1269 = vmatpush2.xpose.msra.mxu0 0.0
        %1270 = vmatprep.subr.mxu0 0.0
        %1271 = vmatpush2.xpose.msra.mxu0 0.0
        %1272 = vmatprep.subr.mxu0 0.0
        %1273 = vmatpush2.xpose.msra.mxu0 0.0
        %1274 = vmatprep.subr.mxu0 0.0
        %1275 = vmatpush2.xpose.msra.mxu0 0.0
        %1276 = vmatprep.subr.mxu0 0.0
        %1277 = vmatpush2.xpose.msra.mxu0 0.0
        %1278 = vmatprep.subr.mxu0 0.0
        %1279 = vmatpush2.xpose.msra.mxu0 0.0
        %1280 = vmatprep.mubr.f32.mxu0 0.0
        %1281 = vmatmul.mubr.f32.gmra.mxu0 %v1212
        %v1282 = vpop.f32.mrf.mxu0
        %v1283 = vadd.f32 0.0, %v1282
        %v1284 = vpop.f32.mrf.mxu0
        %1285 = vdwg.mxu0
        %v1286 = vsel %vm435, %v1283, -inf
        %1287 = vmax.xlane.f32.xlu0 %v1286
        %v1288 = vpop.xlane.xlu0 %1287
        %v1289 = vsub.f32 %v1283, %v1288
        %v1290 = vmul.f32 %v1289, 1.442695
        %v1291 = vpow.pop %v1290
        %v1292 = vsel %vm435, %v1291, 0.0
        %1293 = vadd.xlane.f32.xlu0 %v1292
        %v1294 = vpop.xlane.xlu0 %1293
        %v1295 = vrcp.pop %v1294
        %v1296 = vmul.f32 %v1291, %v1295
        %1297 = vrot.lane.b32.xlu0 %v352, 44
        %v1298 = vpop.permute.xlu0 %1297
        %v1301 = vsel %vm435, %v1296, 0
        %1303 = vmatprep.subr.mxu0 0.0
        %1304 = vmatpush1.msra.mxu0 0.0
        %1305 = vmatprep.subr.mxu0 0.0
        %1306 = vmatpush1.msra.mxu0 0.0
        %1307 = vmatprep.subr.mxu0 0.0
        %1308 = vmatpush1.msra.mxu0 0.0
        %1309 = vmatprep.subr.mxu0 0.0
        %1310 = vmatpush1.msra.mxu0 0.0
        %1311 = vmatprep.subr.mxu0 0.0
        %1312 = vmatpush1.msra.mxu0 0.0
        %1313 = vmatprep.subr.mxu0 0.0
        %1314 = vmatpush1.msra.mxu0 0.0
        %1315 = vmatprep.subr.mxu0 0.0
        %1316 = vmatpush1.msra.mxu0 0.0
        %1317 = vmatprep.subr.mxu0 0.0
        %1318 = vmatpush1.msra.mxu0 0.0
        %1319 = vmatprep.subr.mxu0 0.0
        %1320 = vmatpush1.msra.mxu0 0.0
        %1321 = vmatprep.subr.mxu0 0.0
        %1322 = vmatpush1.msra.mxu0 0.0
        %1323 = vmatprep.subr.mxu0 0.0
        %1324 = vmatpush1.msra.mxu0 0.0
        %1325 = vmatprep.subr.mxu0 0.0
        %1326 = vmatpush1.msra.mxu0 0.0
        %1327 = vmatprep.subr.mxu0 0.0
        %1328 = vmatpush1.msra.mxu0 0.0
        %1329 = vmatprep.subr.mxu0 0.0
        %1330 = vmatpush1.msra.mxu0 0.0
        %1331 = vmatprep.subr.mxu0 0.0
        %1332 = vmatpush1.msra.mxu0 0.0
        %1333 = vmatprep.subr.mxu0 0.0
        %1334 = vmatpush1.msra.mxu0 %v1298
        %1335 = vmatprep.subr.mxu0 0.0
        %1336 = vmatpush2.msra.mxu0 0.0
        %1337 = vmatprep.subr.mxu0 0.0
        %1338 = vmatpush2.msra.mxu0 0.0
        %1339 = vmatprep.subr.mxu0 0.0
        %1340 = vmatpush2.msra.mxu0 0.0
        %1341 = vmatprep.subr.mxu0 0.0
        %1342 = vmatpush2.msra.mxu0 0.0
        %1343 = vmatprep.subr.mxu0 0.0
        %1344 = vmatpush2.msra.mxu0 0.0
        %1345 = vmatprep.subr.mxu0 0.0
        %1346 = vmatpush2.msra.mxu0 0.0
        %1347 = vmatprep.subr.mxu0 0.0
        %1348 = vmatpush2.msra.mxu0 0.0
        %1349 = vmatprep.subr.mxu0 0.0
        %1350 = vmatpush2.msra.mxu0 0.0
        %1351 = vmatprep.subr.mxu0 0.0
        %1352 = vmatpush2.msra.mxu0 0.0
        %1353 = vmatprep.subr.mxu0 0.0
        %1354 = vmatpush2.msra.mxu0 0.0
        %1355 = vmatprep.subr.mxu0 0.0
        %1356 = vmatpush2.msra.mxu0 0.0
        %1357 = vmatprep.subr.mxu0 0.0
        %1358 = vmatpush2.msra.mxu0 0.0
        %1359 = vmatprep.subr.mxu0 0.0
        %1360 = vmatpush2.msra.mxu0 0.0
        %1361 = vmatprep.subr.mxu0 0.0
        %1362 = vmatpush2.msra.mxu0 0.0
        %1363 = vmatprep.subr.mxu0 0.0
        %1364 = vmatpush2.msra.mxu0 0.0
        %1365 = vmatprep.subr.mxu0 0.0
        %1366 = vmatpush2.msra.mxu0 0.0
        %1367 = vmatprep.mubr.f32.mxu0 0.0
        %1368 = vmatmul.mubr.f32.gmra.mxu0 %v1301
        %v1369 = vpop.f32.mrf.mxu0
        %v1370 = vadd.f32 0.0, %v1369
        %v1371 = vpop.f32.mrf.mxu0
        %1372 = vdwg.mxu0
        %1374 = vrot.lane.b32.xlu0 %v1370, 20
        %v1375 = vpop.permute.xlu0 %1374
        %vm1377 = vcmask 195744
        %1378 = vst.msk [vmem:[#allocation2] sm:$0xff] %vm1377, %v1375
        %1379 = vrot.lane.b32.xlu0 %v355, 104
        %v1380 = vpop.permute.xlu0 %1379
        %1381 = vrot.lane.b32.xlu0 %v352, 72
        %v1382 = vpop.permute.xlu0 %1381
        %v1383 = vsel %vm359, %v1380, 0
        %v1385 = vsel %vm359, %v1382, 0
        %1387 = vmatprep.subr.mxu0 0.0
        %1388 = vmatpush1.xpose.msra.mxu0 0.0
        %1389 = vmatprep.subr.mxu0 0.0
        %1390 = vmatpush1.xpose.msra.mxu0 0.0
        %1391 = vmatprep.subr.mxu0 0.0
        %1392 = vmatpush1.xpose.msra.mxu0 0.0
        %1393 = vmatprep.subr.mxu0 0.0
        %1394 = vmatpush1.xpose.msra.mxu0 0.0
        %1395 = vmatprep.subr.mxu0 0.0
        %1396 = vmatpush1.xpose.msra.mxu0 0.0
        %1397 = vmatprep.subr.mxu0 0.0
        %1398 = vmatpush1.xpose.msra.mxu0 0.0
        %1399 = vmatprep.subr.mxu0 0.0
        %1400 = vmatpush1.xpose.msra.mxu0 0.0
        %1401 = vmatprep.subr.mxu0 0.0
        %1402 = vmatpush1.xpose.msra.mxu0 0.0
        %1403 = vmatprep.subr.mxu0 0.0
        %1404 = vmatpush1.xpose.msra.mxu0 0.0
        %1405 = vmatprep.subr.mxu0 0.0
        %1406 = vmatpush1.xpose.msra.mxu0 0.0
        %1407 = vmatprep.subr.mxu0 0.0
        %1408 = vmatpush1.xpose.msra.mxu0 0.0
        %1409 = vmatprep.subr.mxu0 0.0
        %1410 = vmatpush1.xpose.msra.mxu0 0.0
        %1411 = vmatprep.subr.mxu0 0.0
        %1412 = vmatpush1.xpose.msra.mxu0 0.0
        %1413 = vmatprep.subr.mxu0 0.0
        %1414 = vmatpush1.xpose.msra.mxu0 0.0
        %1415 = vmatprep.subr.mxu0 0.0
        %1416 = vmatpush1.xpose.msra.mxu0 0.0
        %1417 = vmatprep.subr.mxu0 0.0
        %1418 = vmatpush1.xpose.msra.mxu0 %v1385
        %1419 = vmatprep.subr.mxu0 0.0
        %1420 = vmatpush2.xpose.msra.mxu0 0.0
        %1421 = vmatprep.subr.mxu0 0.0
        %1422 = vmatpush2.xpose.msra.mxu0 0.0
        %1423 = vmatprep.subr.mxu0 0.0
        %1424 = vmatpush2.xpose.msra.mxu0 0.0
        %1425 = vmatprep.subr.mxu0 0.0
        %1426 = vmatpush2.xpose.msra.mxu0 0.0
        %1427 = vmatprep.subr.mxu0 0.0
        %1428 = vmatpush2.xpose.msra.mxu0 0.0
        %1429 = vmatprep.subr.mxu0 0.0
        %1430 = vmatpush2.xpose.msra.mxu0 0.0
        %1431 = vmatprep.subr.mxu0 0.0
        %1432 = vmatpush2.xpose.msra.mxu0 0.0
        %1433 = vmatprep.subr.mxu0 0.0
        %1434 = vmatpush2.xpose.msra.mxu0 0.0
        %1435 = vmatprep.subr.mxu0 0.0
        %1436 = vmatpush2.xpose.msra.mxu0 0.0
        %1437 = vmatprep.subr.mxu0 0.0
        %1438 = vmatpush2.xpose.msra.mxu0 0.0
        %1439 = vmatprep.subr.mxu0 0.0
        %1440 = vmatpush2.xpose.msra.mxu0 0.0
        %1441 = vmatprep.subr.mxu0 0.0
        %1442 = vmatpush2.xpose.msra.mxu0 0.0
        %1443 = vmatprep.subr.mxu0 0.0
        %1444 = vmatpush2.xpose.msra.mxu0 0.0
        %1445 = vmatprep.subr.mxu0 0.0
        %1446 = vmatpush2.xpose.msra.mxu0 0.0
        %1447 = vmatprep.subr.mxu0 0.0
        %1448 = vmatpush2.xpose.msra.mxu0 0.0
        %1449 = vmatprep.subr.mxu0 0.0
        %1450 = vmatpush2.xpose.msra.mxu0 0.0
        %1451 = vmatprep.mubr.f32.mxu0 0.0
        %1452 = vmatmul.mubr.f32.gmra.mxu0 %v1383
        %v1453 = vpop.f32.mrf.mxu0
        %v1454 = vadd.f32 0.0, %v1453
        %v1455 = vpop.f32.mrf.mxu0
        %1456 = vdwg.mxu0
        %v1457 = vsel %vm435, %v1454, -inf
        %1458 = vmax.xlane.f32.xlu0 %v1457
        %v1459 = vpop.xlane.xlu0 %1458
        %v1460 = vsub.f32 %v1454, %v1459
        %v1461 = vmul.f32 %v1460, 1.442695
        %v1462 = vpow.pop %v1461
        %v1463 = vsel %vm435, %v1462, 0.0
        %1464 = vadd.xlane.f32.xlu0 %v1463
        %v1465 = vpop.xlane.xlu0 %1464
        %v1466 = vrcp.pop %v1465
        %v1467 = vmul.f32 %v1462, %v1466
        %1468 = vrot.lane.b32.xlu0 %v352, 40
        %v1469 = vpop.permute.xlu0 %1468
        %v1472 = vsel %vm435, %v1467, 0
        %1474 = vmatprep.subr.mxu0 0.0
        %1475 = vmatpush1.msra.mxu0 0.0
        %1476 = vmatprep.subr.mxu0 0.0
        %1477 = vmatpush1.msra.mxu0 0.0
        %1478 = vmatprep.subr.mxu0 0.0
        %1479 = vmatpush1.msra.mxu0 0.0
        %1480 = vmatprep.subr.mxu0 0.0
        %1481 = vmatpush1.msra.mxu0 0.0
        %1482 = vmatprep.subr.mxu0 0.0
        %1483 = vmatpush1.msra.mxu0 0.0
        %1484 = vmatprep.subr.mxu0 0.0
        %1485 = vmatpush1.msra.mxu0 0.0
        %1486 = vmatprep.subr.mxu0 0.0
        %1487 = vmatpush1.msra.mxu0 0.0
        %1488 = vmatprep.subr.mxu0 0.0
        %1489 = vmatpush1.msra.mxu0 0.0
        %1490 = vmatprep.subr.mxu0 0.0
        %1491 = vmatpush1.msra.mxu0 0.0
        %1492 = vmatprep.subr.mxu0 0.0
        %1493 = vmatpush1.msra.mxu0 0.0
        %1494 = vmatprep.subr.mxu0 0.0
        %1495 = vmatpush1.msra.mxu0 0.0
        %1496 = vmatprep.subr.mxu0 0.0
        %1497 = vmatpush1.msra.mxu0 0.0
        %1498 = vmatprep.subr.mxu0 0.0
        %1499 = vmatpush1.msra.mxu0 0.0
        %1500 = vmatprep.subr.mxu0 0.0
        %1501 = vmatpush1.msra.mxu0 0.0
        %1502 = vmatprep.subr.mxu0 0.0
        %1503 = vmatpush1.msra.mxu0 0.0
        %1504 = vmatprep.subr.mxu0 0.0
        %1505 = vmatpush1.msra.mxu0 %v1469
        %1506 = vmatprep.subr.mxu0 0.0
        %1507 = vmatpush2.msra.mxu0 0.0
        %1508 = vmatprep.subr.mxu0 0.0
        %1509 = vmatpush2.msra.mxu0 0.0
        %1510 = vmatprep.subr.mxu0 0.0
        %1511 = vmatpush2.msra.mxu0 0.0
        %1512 = vmatprep.subr.mxu0 0.0
        %1513 = vmatpush2.msra.mxu0 0.0
        %1514 = vmatprep.subr.mxu0 0.0
        %1515 = vmatpush2.msra.mxu0 0.0
        %1516 = vmatprep.subr.mxu0 0.0
        %1517 = vmatpush2.msra.mxu0 0.0
        %1518 = vmatprep.subr.mxu0 0.0
        %1519 = vmatpush2.msra.mxu0 0.0
        %1520 = vmatprep.subr.mxu0 0.0
        %1521 = vmatpush2.msra.mxu0 0.0
        %1522 = vmatprep.subr.mxu0 0.0
        %1523 = vmatpush2.msra.mxu0 0.0
        %1524 = vmatprep.subr.mxu0 0.0
        %1525 = vmatpush2.msra.mxu0 0.0
        %1526 = vmatprep.subr.mxu0 0.0
        %1527 = vmatpush2.msra.mxu0 0.0
        %1528 = vmatprep.subr.mxu0 0.0
        %1529 = vmatpush2.msra.mxu0 0.0
        %1530 = vmatprep.subr.mxu0 0.0
        %1531 = vmatpush2.msra.mxu0 0.0
        %1532 = vmatprep.subr.mxu0 0.0
        %1533 = vmatpush2.msra.mxu0 0.0
        %1534 = vmatprep.subr.mxu0 0.0
        %1535 = vmatpush2.msra.mxu0 0.0
        %1536 = vmatprep.subr.mxu0 0.0
        %1537 = vmatpush2.msra.mxu0 0.0
        %1538 = vmatprep.mubr.f32.mxu0 0.0
        %1539 = vmatmul.mubr.f32.gmra.mxu0 %v1472
        %v1540 = vpop.f32.mrf.mxu0
        %v1541 = vadd.f32 0.0, %v1540
        %v1542 = vpop.f32.mrf.mxu0
        %1543 = vdwg.mxu0
        %1545 = vrot.lane.b32.xlu0 %v1541, 24
        %v1546 = vpop.permute.xlu0 %1545
        %vm1548 = vcmask 228544
        %1549 = vst.msk [vmem:[#allocation2] sm:$0xff] %vm1548, %v1546
        %1550 = vrot.lane.b32.xlu0 %v355, 100
        %v1551 = vpop.permute.xlu0 %1550
        %1552 = vrot.lane.b32.xlu0 %v352, 68
        %v1553 = vpop.permute.xlu0 %1552
        %v1554 = vsel %vm359, %v1551, 0
        %v1556 = vsel %vm359, %v1553, 0
        %1558 = vmatprep.subr.mxu0 0.0
        %1559 = vmatpush1.xpose.msra.mxu0 0.0
        %1560 = vmatprep.subr.mxu0 0.0
        %1561 = vmatpush1.xpose.msra.mxu0 0.0
        %1562 = vmatprep.subr.mxu0 0.0
        %1563 = vmatpush1.xpose.msra.mxu0 0.0
        %1564 = vmatprep.subr.mxu0 0.0
        %1565 = vmatpush1.xpose.msra.mxu0 0.0
        %1566 = vmatprep.subr.mxu0 0.0
        %1567 = vmatpush1.xpose.msra.mxu0 0.0
        %1568 = vmatprep.subr.mxu0 0.0
        %1569 = vmatpush1.xpose.msra.mxu0 0.0
        %1570 = vmatprep.subr.mxu0 0.0
        %1571 = vmatpush1.xpose.msra.mxu0 0.0
        %1572 = vmatprep.subr.mxu0 0.0
        %1573 = vmatpush1.xpose.msra.mxu0 0.0
        %1574 = vmatprep.subr.mxu0 0.0
        %1575 = vmatpush1.xpose.msra.mxu0 0.0
        %1576 = vmatprep.subr.mxu0 0.0
        %1577 = vmatpush1.xpose.msra.mxu0 0.0
        %1578 = vmatprep.subr.mxu0 0.0
        %1579 = vmatpush1.xpose.msra.mxu0 0.0
        %1580 = vmatprep.subr.mxu0 0.0
        %1581 = vmatpush1.xpose.msra.mxu0 0.0
        %1582 = vmatprep.subr.mxu0 0.0
        %1583 = vmatpush1.xpose.msra.mxu0 0.0
        %1584 = vmatprep.subr.mxu0 0.0
        %1585 = vmatpush1.xpose.msra.mxu0 0.0
        %1586 = vmatprep.subr.mxu0 0.0
        %1587 = vmatpush1.xpose.msra.mxu0 0.0
        %1588 = vmatprep.subr.mxu0 0.0
        %1589 = vmatpush1.xpose.msra.mxu0 %v1556
        %1590 = vmatprep.subr.mxu0 0.0
        %1591 = vmatpush2.xpose.msra.mxu0 0.0
        %1592 = vmatprep.subr.mxu0 0.0
        %1593 = vmatpush2.xpose.msra.mxu0 0.0
        %1594 = vmatprep.subr.mxu0 0.0
        %1595 = vmatpush2.xpose.msra.mxu0 0.0
        %1596 = vmatprep.subr.mxu0 0.0
        %1597 = vmatpush2.xpose.msra.mxu0 0.0
        %1598 = vmatprep.subr.mxu0 0.0
        %1599 = vmatpush2.xpose.msra.mxu0 0.0
        %1600 = vmatprep.subr.mxu0 0.0
        %1601 = vmatpush2.xpose.msra.mxu0 0.0
        %1602 = vmatprep.subr.mxu0 0.0
        %1603 = vmatpush2.xpose.msra.mxu0 0.0
        %1604 = vmatprep.subr.mxu0 0.0
        %1605 = vmatpush2.xpose.msra.mxu0 0.0
        %1606 = vmatprep.subr.mxu0 0.0
        %1607 = vmatpush2.xpose.msra.mxu0 0.0
        %1608 = vmatprep.subr.mxu0 0.0
        %1609 = vmatpush2.xpose.msra.mxu0 0.0
        %1610 = vmatprep.subr.mxu0 0.0
        %1611 = vmatpush2.xpose.msra.mxu0 0.0
        %1612 = vmatprep.subr.mxu0 0.0
        %1613 = vmatpush2.xpose.msra.mxu0 0.0
        %1614 = vmatprep.subr.mxu0 0.0
        %1615 = vmatpush2.xpose.msra.mxu0 0.0
        %1616 = vmatprep.subr.mxu0 0.0
        %1617 = vmatpush2.xpose.msra.mxu0 0.0
        %1618 = vmatprep.subr.mxu0 0.0
        %1619 = vmatpush2.xpose.msra.mxu0 0.0
        %1620 = vmatprep.subr.mxu0 0.0
        %1621 = vmatpush2.xpose.msra.mxu0 0.0
        %1622 = vmatprep.mubr.f32.mxu0 0.0
        %1623 = vmatmul.mubr.f32.gmra.mxu0 %v1554
        %v1624 = vpop.f32.mrf.mxu0
        %v1625 = vadd.f32 0.0, %v1624
        %v1626 = vpop.f32.mrf.mxu0
        %1627 = vdwg.mxu0
        %v1628 = vsel %vm435, %v1625, -inf
        %1629 = vmax.xlane.f32.xlu0 %v1628
        %v1630 = vpop.xlane.xlu0 %1629
        %v1631 = vsub.f32 %v1625, %v1630
        %v1632 = vmul.f32 %v1631, 1.442695
        %v1633 = vpow.pop %v1632
        %v1634 = vsel %vm435, %v1633, 0.0
        %1635 = vadd.xlane.f32.xlu0 %v1634
        %v1636 = vpop.xlane.xlu0 %1635
        %v1637 = vrcp.pop %v1636
        %v1638 = vmul.f32 %v1633, %v1637
        %1639 = vrot.lane.b32.xlu0 %v352, 36
        %v1640 = vpop.permute.xlu0 %1639
        %v1643 = vsel %vm435, %v1638, 0
        %1645 = vmatprep.subr.mxu0 0.0
        %1646 = vmatpush1.msra.mxu0 0.0
        %1647 = vmatprep.subr.mxu0 0.0
        %1648 = vmatpush1.msra.mxu0 0.0
        %1649 = vmatprep.subr.mxu0 0.0
        %1650 = vmatpush1.msra.mxu0 0.0
        %1651 = vmatprep.subr.mxu0 0.0
        %1652 = vmatpush1.msra.mxu0 0.0
        %1653 = vmatprep.subr.mxu0 0.0
        %1654 = vmatpush1.msra.mxu0 0.0
        %1655 = vmatprep.subr.mxu0 0.0
        %1656 = vmatpush1.msra.mxu0 0.0
        %1657 = vmatprep.subr.mxu0 0.0
        %1658 = vmatpush1.msra.mxu0 0.0
        %1659 = vmatprep.subr.mxu0 0.0
        %1660 = vmatpush1.msra.mxu0 0.0
        %1661 = vmatprep.subr.mxu0 0.0
        %1662 = vmatpush1.msra.mxu0 0.0
        %1663 = vmatprep.subr.mxu0 0.0
        %1664 = vmatpush1.msra.mxu0 0.0
        %1665 = vmatprep.subr.mxu0 0.0
        %1666 = vmatpush1.msra.mxu0 0.0
        %1667 = vmatprep.subr.mxu0 0.0
        %1668 = vmatpush1.msra.mxu0 0.0
        %1669 = vmatprep.subr.mxu0 0.0
        %1670 = vmatpush1.msra.mxu0 0.0
        %1671 = vmatprep.subr.mxu0 0.0
        %1672 = vmatpush1.msra.mxu0 0.0
        %1673 = vmatprep.subr.mxu0 0.0
        %1674 = vmatpush1.msra.mxu0 0.0
        %1675 = vmatprep.subr.mxu0 0.0
        %1676 = vmatpush1.msra.mxu0 %v1640
        %1677 = vmatprep.subr.mxu0 0.0
        %1678 = vmatpush2.msra.mxu0 0.0
        %1679 = vmatprep.subr.mxu0 0.0
        %1680 = vmatpush2.msra.mxu0 0.0
        %1681 = vmatprep.subr.mxu0 0.0
        %1682 = vmatpush2.msra.mxu0 0.0
        %1683 = vmatprep.subr.mxu0 0.0
        %1684 = vmatpush2.msra.mxu0 0.0
        %1685 = vmatprep.subr.mxu0 0.0
        %1686 = vmatpush2.msra.mxu0 0.0
        %1687 = vmatprep.subr.mxu0 0.0
        %1688 = vmatpush2.msra.mxu0 0.0
        %1689 = vmatprep.subr.mxu0 0.0
        %1690 = vmatpush2.msra.mxu0 0.0
        %1691 = vmatprep.subr.mxu0 0.0
        %1692 = vmatpush2.msra.mxu0 0.0
        %1693 = vmatprep.subr.mxu0 0.0
        %1694 = vmatpush2.msra.mxu0 0.0
        %1695 = vmatprep.subr.mxu0 0.0
        %1696 = vmatpush2.msra.mxu0 0.0
        %1697 = vmatprep.subr.mxu0 0.0
        %1698 = vmatpush2.msra.mxu0 0.0
        %1699 = vmatprep.subr.mxu0 0.0
        %1700 = vmatpush2.msra.mxu0 0.0
        %1701 = vmatprep.subr.mxu0 0.0
        %1702 = vmatpush2.msra.mxu0 0.0
        %1703 = vmatprep.subr.mxu0 0.0
        %1704 = vmatpush2.msra.mxu0 0.0
        %1705 = vmatprep.subr.mxu0 0.0
        %1706 = vmatpush2.msra.mxu0 0.0
        %1707 = vmatprep.subr.mxu0 0.0
        %1708 = vmatpush2.msra.mxu0 0.0
        %1709 = vmatprep.mubr.f32.mxu0 0.0
        %1710 = vmatmul.mubr.f32.gmra.mxu0 %v1643
        %v1711 = vpop.f32.mrf.mxu0
        %v1712 = vadd.f32 0.0, %v1711
        %v1713 = vpop.f32.mrf.mxu0
        %1714 = vdwg.mxu0
        %1716 = vrot.lane.b32.xlu0 %v1712, 28
        %v1717 = vpop.permute.xlu0 %1716
        %vm1719 = vcmask 261344
        %1720 = vst.msk [vmem:[#allocation2] sm:$0xff] %vm1719, %v1717
        %v1721 = vld [vmem:[#allocation2] sm:$0xff]
        %v1722 = vld [vmem:[#allocation8] sm:$0xff]
        %v1723 = vld [vmem:[#allocation8 + $0x8] sm:$0xff]
        %v1724 = vld [vmem:[#allocation8 + $0x10] sm:$0xff]
        %v1725 = vld [vmem:[#allocation8 + $0x18] sm:$0xff]
        %v1726 = vld [vmem:[%s4] sm:$0x1]
        %v1728 = vlaneseq
        %v1729 = vshrl.u32 %v1728, 7
        %v1730 = vsub.s32 0, %v1729
        %v1731 = vrot.slane %v1726, %v1730
        %v1734 = vsel %vm281, %v1721, 0
        %1736 = vmatprep.subr.mxu0 0.0
        %1737 = vmatpush1.msra.mxu0 0.0
        %1738 = vmatprep.subr.mxu0 0.0
        %1739 = vmatpush1.msra.mxu0 0.0
        %1740 = vmatprep.subr.mxu0 0.0
        %1741 = vmatpush1.msra.mxu0 0.0
        %1742 = vmatprep.subr.mxu0 0.0
        %1743 = vmatpush1.msra.mxu0 0.0
        %1744 = vmatprep.subr.mxu0 0.0
        %1745 = vmatpush1.msra.mxu0 0.0
        %1746 = vmatprep.subr.mxu0 0.0
        %1747 = vmatpush1.msra.mxu0 0.0
        %1748 = vmatprep.subr.mxu0 0.0
        %1749 = vmatpush1.msra.mxu0 0.0
        %1750 = vmatprep.subr.mxu0 0.0
        %1751 = vmatpush1.msra.mxu0 0.0
        %1752 = vmatprep.subr.mxu0 0.0
        %1753 = vmatpush1.msra.mxu0 0.0
        %1754 = vmatprep.subr.mxu0 0.0
        %1755 = vmatpush1.msra.mxu0 0.0
        %1756 = vmatprep.subr.mxu0 0.0
        %1757 = vmatpush1.msra.mxu0 0.0
        %1758 = vmatprep.subr.mxu0 0.0
        %1759 = vmatpush1.msra.mxu0 0.0
        %1760 = vmatprep.subr.mxu0 0.0
        %1761 = vmatpush1.msra.mxu0 %v1725
        %1762 = vmatprep.subr.mxu0 0.0
        %1763 = vmatpush1.msra.mxu0 %v1724
        %1764 = vmatprep.subr.mxu0 0.0
        %1765 = vmatpush1.msra.mxu0 %v1723
        %1766 = vmatprep.subr.mxu0 0.0
        %1767 = vmatpush1.msra.mxu0 %v1722
        %1768 = vmatprep.subr.mxu0 0.0
        %1769 = vmatpush2.msra.mxu0 0.0
        %1770 = vmatprep.subr.mxu0 0.0
        %1771 = vmatpush2.msra.mxu0 0.0
        %1772 = vmatprep.subr.mxu0 0.0
        %1773 = vmatpush2.msra.mxu0 0.0
        %1774 = vmatprep.subr.mxu0 0.0
        %1775 = vmatpush2.msra.mxu0 0.0
        %1776 = vmatprep.subr.mxu0 0.0
        %1777 = vmatpush2.msra.mxu0 0.0
        %1778 = vmatprep.subr.mxu0 0.0
        %1779 = vmatpush2.msra.mxu0 0.0
        %1780 = vmatprep.subr.mxu0 0.0
        %1781 = vmatpush2.msra.mxu0 0.0
        %1782 = vmatprep.subr.mxu0 0.0
        %1783 = vmatpush2.msra.mxu0 0.0
        %1784 = vmatprep.subr.mxu0 0.0
        %1785 = vmatpush2.msra.mxu0 0.0
        %1786 = vmatprep.subr.mxu0 0.0
        %1787 = vmatpush2.msra.mxu0 0.0
        %1788 = vmatprep.subr.mxu0 0.0
        %1789 = vmatpush2.msra.mxu0 0.0
        %1790 = vmatprep.subr.mxu0 0.0
        %1791 = vmatpush2.msra.mxu0 0.0
        %1792 = vmatprep.subr.mxu0 0.0
        %1793 = vmatpush2.msra.mxu0 0.0
        %1794 = vmatprep.subr.mxu0 0.0
        %1795 = vmatpush2.msra.mxu0 0.0
        %1796 = vmatprep.subr.mxu0 0.0
        %1797 = vmatpush2.msra.mxu0 0.0
        %1798 = vmatprep.subr.mxu0 0.0
        %1799 = vmatpush2.msra.mxu0 0.0
        %1800 = vmatprep.mubr.f32.mxu0 0.0
        %1801 = vmatmul.mubr.f32.gmra.mxu0 %v1734
        %v1802 = vpop.f32.mrf.mxu0
        %v1803 = vadd.f32 %v1731, %v1802
        %v1804 = vpop.f32.mrf.mxu0
        %1805 = vdwg.mxu0
        %1806 = vst.msk [vmem:[%s268] sm:$0xff] %vm281, %v1803
        %s1807 = sand.u32 %s141, 1
        %s1808 = scalar_lea.sflag [#allocation5], %s1807
        %s1809 = sand.u32 %s141, 1
        %s1810 = smul.addr %s1809, 8
        %s1811 = scalar_lea.vmem [#allocation9], %s1810
        // Predicated region
        $region53: #{gated_attention_forward.1} parent=39 // pred_check
          %p1812 = pneg %p151
        $region54: #{gated_attention_forward.1} parent=39 // pred_check_branch
          %1814 = sbr.rel (%p1812) target = $region56
        $region55: #{gated_attention_forward.1} parent=39 // pred_region
          %s1816 = ssub.s32 128, 128
          %1817 = vsyncadd %s1808, %s1816
          %s1818 = smul.addr %s23, 128
          %s1819 = scalar_lea.hbm %s5, %s1818
          %s1821 = sshll.u32 %s1811, 4
          %s1822 = int_to_ptr.vmem [resolvable:$true] %s1821
          %1824 = dma.vmem_to_hbm [thread:$0]  %s1822, 128, %s1819, %s1808
        $region56: #{gated_attention_forward.1} parent=39 // pred_fallthru
          _
      $region40: #{gated_attention_forward.1} parent=5 // pred_fallthru
        _
      %p1825 = scmp.le.s32.totalorder 2, %s18
      // Predicated region
      $region57: #{gated_attention_forward.1} parent=5 // pred_check
        %p1826 = pneg %p1825
      $region58: #{gated_attention_forward.1} parent=5 // pred_check_branch
        %1828 = sbr.rel (%p1826) target = $region60
      $region59: #{gated_attention_forward.1} parent=5 // pred_region
        %s1829 = ssub.s32 %s18, 2
        // Predicated region
        $region61: #{gated_attention_forward.1} parent=59 // pred_check
          %p1830 = pneg %p157
        $region62: #{gated_attention_forward.1} parent=59 // pred_check_branch
          %1832 = sbr.rel (%p1830) target = $region64
        $region63: #{gated_attention_forward.1} parent=59 // pred_region
          %s1833 = sand.u32 %s142, 1
          %s1834 = scalar_lea.sflag [#allocation5], %s1833
          %s1835 = sand.u32 %s142, 1
          %s1836 = smul.addr %s1835, 8
          %s1837 = scalar_lea.vmem [#allocation9], %s1836
          %1838 = dma.done %s1834, 128
        $region64: #{gated_attention_forward.1} parent=59 // pred_fallthru
          _
      $region60: #{gated_attention_forward.1} parent=5 // pred_fallthru
        _
    $region6: #{gated_attention_forward.1} parent=1 // loop_footer
      %s22 = sadd.s32 1, %s18
    $region7: #{gated_attention_forward.1} parent=1 // loop_footer_branch
      %17 = sbr.rel target = $region3
    $region8: #{gated_attention_forward.1} parent=1 // loop_exit
      _
    %1839 = vsyncpa [#allocation4], 1
    %s1840 = scalar_lea.sflag [#allocation4], 1
    %1841 = vsyncpa %s1840, 1
    %1842 = vsyncpa [#allocation7], 1
    %1843 = vsyncpa [#allocation5], 1
    %s1844 = scalar_lea.sflag [#allocation5], 1
    %1845 = vsyncpa %s1844, 1

</llo_original>
